<compile_context>
chip_gen: v7x
topology: tpu7x:2x2x1
jax: 0.10.0
libtpu: 0.0.40
codegen_flags: <defaults>
</compile_context>

<pallas_src>
import functools

import jax
import jax.numpy as jnp
from jax.experimental import pallas as pl
from jax.experimental.pallas import tpu as pltpu

# ----------------------------- model config ---------------------------------
VOCAB        = 128
TYPE_VOCAB   = 2
MAX_POS      = 64
HIDDEN       = 32
N_HEADS      = 2
HEAD_DIM     = HIDDEN // N_HEADS
INTERMEDIATE = 64
N_LAYERS     = 2
NUM_LABELS   = 9
CLS_PAD      = 128            # lane-dense padded classifier width
VEC_W        = 128            # packed small-parameter row width
LN_EPS       = 1e-12

VMEM = pl.BlockSpec(memory_space=pltpu.MemorySpace.VMEM)

# packed small-parameter row layout
_ROW_EMB_G, _ROW_EMB_B = 0, 1
_LAYER_BASE = 2
_ROWS_PER_LAYER = 8           # bqkv, bo, ln1_g, ln1_b, b1, b2, ln2_g, ln2_b
_ROW_CLS_B = _LAYER_BASE + N_LAYERS * _ROWS_PER_LAYER
VEC_ROWS = _ROW_CLS_B + 1


# ------------------------------ fused kernel ---------------------------------
def _layer_norm(x, g, b):
    mean = jnp.mean(x, axis=-1, keepdims=True)
    var = jnp.mean((x - mean) * (x - mean), axis=-1, keepdims=True)
    inv = jax.lax.rsqrt(var + jnp.float32(LN_EPS))
    return (x - mean) * inv * g + b


def _gelu(x):
    # exact (erf) GELU, as in BERT
    return 0.5 * x * (1.0 + jax.lax.erf(x * jnp.float32(0.7071067811865476)))


def _bert_fused_kernel(ids_ref, tt_ref, amask_ref, struct_ref,
                       word_ref, pos_ref, tok_ref,
                       wqkv_ref, wo_ref, w1_ref, w2_ref, clsw_ref,
                       vec_ref, logits_ref, *, B, S):
    """Embeddings + encoder stack + classifier, fully VMEM-resident."""
    BS = B * S
    f32 = jnp.float32
    bf16 = jnp.bfloat16
    scale = f32(1.0 / (HEAD_DIM ** 0.5))

    def vrow(r, width):
        return vec_ref[r:r + 1, 0:width]                          # [1, width]

    # ---- embeddings (gathers fused in-kernel) --------------------------------
    ids = ids_ref[...]                                             # [BS,1] i32
    onehot = (jax.lax.broadcasted_iota(jnp.int32, (BS, VOCAB), 1) == ids)
    word = jnp.dot(onehot.astype(bf16), word_ref[...],
                   preferred_element_type=f32)                     # [BS, H]

    tt = tt_ref[...]                                               # [BS,1] i32
    tok = jnp.where(tt == 0, tok_ref[0:1, :], tok_ref[1:2, :])     # [BS, H]

    pos = jnp.concatenate([pos_ref[0:S, :]] * B, axis=0)           # [BS, H]

    x = _layer_norm(word + tok + pos,
                    vrow(_ROW_EMB_G, HIDDEN), vrow(_ROW_EMB_B, HIDDEN))

    # ---- additive attention bias, built ONCE (hoisted out of layer loop) ----
    # columns / rows are ordered (head, batch, seq); struct_ref is the
    # compile-time-constant block-diagonal (head,batch) mask.
    am = amask_ref[...].astype(f32)                                # [1, BS]
    key_bias = (1.0 - am) * f32(-10000.0)                          # [1, BS]
    key_bias = jnp.concatenate([key_bias] * N_HEADS, axis=-1)      # [1, N]
    attn_bias = struct_ref[...] + key_bias                         # [N, N]

    # ---- transformer encoder stack (statically unrolled) ---------------------
    for l in range(N_LAYERS):
        base = _LAYER_BASE + l * _ROWS_PER_LAYER

        # fused QKV projection: [BS, 3H]
        qkv = jnp.dot(x.astype(bf16), wqkv_ref[l],
                      preferred_element_type=f32) + vrow(base + 0, 3 * HIDDEN)

        # stack heads along rows -> [N_HEADS*BS, HEAD_DIM]
        def head_rows(off):
            return jnp.concatenate(
                [qkv[:, off + h * HEAD_DIM: off + (h + 1) * HEAD_DIM]
                 for h in range(N_HEADS)], axis=0)
        q_r = head_rows(0)
        k_r = head_rows(HIDDEN)
        v_r = head_rows(2 * HIDDEN)

        # ONE score matmul + ONE softmax + ONE P.V matmul per layer
        s = jnp.dot(q_r.astype(bf16), k_r.T.astype(bf16),
                    preferred_element_type=f32) * scale + attn_bias
        s_max = jnp.max(s, axis=-1, keepdims=True)
        p = jnp.exp(s - s_max)
        denom = jnp.sum(p, axis=-1, keepdims=True)
        p = p * pl.reciprocal(denom, approx=True)
        ctx_r = jnp.dot(p.astype(bf16), v_r.astype(bf16),
                        preferred_element_type=f32)                # [N, dH]

        # un-permute: merge heads back along lanes -> [BS, H]
        ctx = jnp.concatenate(
            [ctx_r[h * BS:(h + 1) * BS, :] for h in range(N_HEADS)], axis=-1)

        # attention output projection + residual + LayerNorm
        attn = jnp.dot(ctx.astype(bf16), wo_ref[l],
                       preferred_element_type=f32) + vrow(base + 1, HIDDEN)
        x = _layer_norm(attn + x, vrow(base + 2, HIDDEN), vrow(base + 3, HIDDEN))

        # FFN (GELU) + residual + LayerNorm
        h1 = jnp.dot(x.astype(bf16), w1_ref[l],
                     preferred_element_type=f32) + vrow(base + 4, INTERMEDIATE)
        h1 = _gelu(h1)
        ffn = jnp.dot(h1.astype(bf16), w2_ref[l],
                      preferred_element_type=f32) + vrow(base + 5, HIDDEN)
        x = _layer_norm(ffn + x, vrow(base + 6, HIDDEN), vrow(base + 7, HIDDEN))

    # ---- classifier (dropout identity at inference), lane-dense output ------
    logits = jnp.dot(x.astype(bf16), clsw_ref[...],
                     preferred_element_type=f32) + vrow(_ROW_CLS_B, CLS_PAD)
    logits_ref[...] = logits.astype(logits_ref.dtype)


# ------------------------------ parameters -----------------------------------
def init_params(key):
    def norm(k, shape):
        return 0.02 * jax.random.normal(k, shape, dtype=jnp.float32)

    def pad_row(v):
        v = jnp.asarray(v, jnp.float32).reshape(-1)
        return jnp.pad(v, (0, VEC_W - v.shape[0]))

    n_keys = 3 + N_LAYERS * 6 + 1
    keys = iter(jax.random.split(key, n_keys))

    word = norm(next(keys), (VOCAB, HIDDEN))
    pos = norm(next(keys), (MAX_POS, HIDDEN))
    tok = norm(next(keys), (TYPE_VOCAB, HIDDEN))

    vec_rows = [pad_row(jnp.ones((HIDDEN,))),       # emb LN gamma
                pad_row(jnp.zeros((HIDDEN,)))]      # emb LN beta

    wqkv, wo, w1, w2 = [], [], [], []
    for _ in range(N_LAYERS):
        wq = norm(next(keys), (HIDDEN, HIDDEN))
        wk = norm(next(keys), (HIDDEN, HIDDEN))
        wv = norm(next(keys), (HIDDEN, HIDDEN))
        wqkv.append(jnp.concatenate([wq, wk, wv], axis=1))          # [H, 3H]
        wo.append(norm(next(keys), (HIDDEN, HIDDEN)))
        w1.append(norm(next(keys), (HIDDEN, INTERMEDIATE)))
        w2.append(norm(next(keys), (INTERMEDIATE, HIDDEN)))
        vec_rows += [
            pad_row(jnp.zeros((3 * HIDDEN,))),    # bqkv
            pad_row(jnp.zeros((HIDDEN,))),        # bo
            pad_row(jnp.ones((HIDDEN,))),         # ln1 gamma
            pad_row(jnp.zeros((HIDDEN,))),        # ln1 beta
            pad_row(jnp.zeros((INTERMEDIATE,))),  # b1
            pad_row(jnp.zeros((HIDDEN,))),        # b2
            pad_row(jnp.ones((HIDDEN,))),         # ln2 gamma
            pad_row(jnp.zeros((HIDDEN,))),        # ln2 beta
        ]

    cls_w = norm(next(keys), (HIDDEN, NUM_LABELS))
    cls_w = jnp.pad(cls_w, ((0, 0), (0, CLS_PAD - NUM_LABELS)))     # lane-dense
    vec_rows.append(pad_row(jnp.zeros((CLS_PAD,))))                 # cls_b

    return {
        "word_emb": word.astype(jnp.bfloat16),       # matmul-gathered -> bf16
        "pos_emb": pos,                              # add-only -> f32
        "tok_emb": tok,                              # add-only -> f32
        "wqkv": jnp.stack(wqkv).astype(jnp.bfloat16),
        "wo": jnp.stack(wo).astype(jnp.bfloat16),
        "w1": jnp.stack(w1).astype(jnp.bfloat16),
        "w2": jnp.stack(w2).astype(jnp.bfloat16),
        "cls_w": cls_w.astype(jnp.bfloat16),
        "vec": jnp.stack(vec_rows),                  # [VEC_ROWS, 128] f32
    }


# ------------------------------ forward pass ---------------------------------
@jax.jit
def model_forward(params, input_ids, token_type_ids, attention_mask):
    """Returns (logits,) — the labels-is-None branch of Model.forward."""
    B, S = input_ids.shape
    BS = B * S
    N = N_HEADS * BS

    # bitcast-style reshapes only (no gathers / no embedding HBM round trip)
    ids = input_ids.reshape(BS, 1).astype(jnp.int32)
    tt = token_type_ids.reshape(BS, 1).astype(jnp.int32)
    am = attention_mask.reshape(1, BS).astype(jnp.int32)

    # block-diagonal (head,batch) structural mask — shape-only, constant-folded
    grp = jnp.arange(N, dtype=jnp.int32) // S
    struct = jnp.where(grp[:, None] == grp[None, :], 0.0, -1e9).astype(jnp.float32)

    kern = functools.partial(_bert_fused_kernel, B=B, S=S)
    logits_pad = pl.pallas_call(
        kern,
        out_shape=jax.ShapeDtypeStruct((BS, CLS_PAD), jnp.float32),
        in_specs=[VMEM] * 13,
        out_specs=VMEM,
    )(ids, tt, am, struct,
      params["word_emb"], params["pos_emb"], params["tok_emb"],
      params["wqkv"], params["wo"], params["w1"], params["w2"],
      params["cls_w"], params["vec"])

    logits = logits_pad[:, :NUM_LABELS].reshape(B, S, NUM_LABELS)
    return (logits,)


# --------------------------------- main --------------------------------------
if __name__ == "__main__":
    key = jax.random.PRNGKey(0)
    pkey, dkey = jax.random.split(key)

    params = init_params(pkey)

    B, S = 2, 8
    input_ids = jax.random.randint(dkey, (B, S), 0, VOCAB, dtype=jnp.int32)
    token_type_ids = jnp.zeros((B, S), dtype=jnp.int32)
    attention_mask = jnp.array([[1, 1, 1, 1, 1, 1, 1, 1],
                                [1, 1, 1, 1, 1, 1, 0, 0]], dtype=jnp.int32)

    (logits,) = model_forward(params, input_ids, token_type_ids, attention_mask)
    logits = jax.block_until_ready(logits)

    assert logits.shape == (B, S, NUM_LABELS)
    assert bool(jnp.all(jnp.isfinite(logits)))
    print("KERNEL_OK")
</pallas_src>

<mosaic_0001>
module attributes {stable_mosaic.version = 11 : i64} {
  func.func @_bert_fused_kernel(%arg0: memref<16x1xi32, #tpu.memory_space<vmem>>, %arg1: memref<16x1xi32, #tpu.memory_space<vmem>>, %arg2: memref<1x16xi32, #tpu.memory_space<vmem>>, %arg3: memref<32x32xf32, #tpu.memory_space<vmem>>, %arg4: memref<128x32xbf16, #tpu.memory_space<vmem>>, %arg5: memref<64x32xf32, #tpu.memory_space<vmem>>, %arg6: memref<2x32xf32, #tpu.memory_space<vmem>>, %arg7: memref<2x32x96xbf16, #tpu.memory_space<vmem>>, %arg8: memref<2x32x32xbf16, #tpu.memory_space<vmem>>, %arg9: memref<2x32x64xbf16, #tpu.memory_space<vmem>>, %arg10: memref<2x64x32xbf16, #tpu.memory_space<vmem>>, %arg11: memref<32x128xbf16, #tpu.memory_space<vmem>>, %arg12: memref<19x128xf32, #tpu.memory_space<vmem>>, %arg13: memref<16x128xf32, #tpu.memory_space<vmem>>) attributes {dimension_semantics = [], scalar_prefetch = 0 : i64, scratch_operands = 0 : i64, tpu.core_type = #tpu.core_type<tc>} {
    %c0 = arith.constant 0 : index
    %c0_0 = arith.constant 0 : index
    %0 = vector.load %arg0[%c0, %c0_0] : memref<16x1xi32, #tpu.memory_space<vmem>>, vector<16x1xi32>
    %1 = tpu.iota {dimensions = array<i32: 1>} : vector<16x128xi32>
    %2 = vector.broadcast %0 : vector<16x1xi32> to vector<16x128xi32>
    %3 = arith.cmpi eq, %1, %2 : vector<16x128xi32>
    %4 = arith.extui %3 : vector<16x128xi1> to vector<16x128xi32>
    %5 = arith.sitofp %4 : vector<16x128xi32> to vector<16x128xf32>
    %6 = arith.truncf %5 : vector<16x128xf32> to vector<16x128xbf16>
    %c0_1 = arith.constant 0 : index
    %c0_2 = arith.constant 0 : index
    %7 = vector.load %arg4[%c0_1, %c0_2] : memref<128x32xbf16, #tpu.memory_space<vmem>>, vector<128x32xbf16>
    %cst = arith.constant dense<0.000000e+00> : vector<16x32xf32>
    %8 = tpu.matmul %6, %7, %cst {dimension_numbers = #tpu.dot_dimension_numbers<[1], [0], [0], [1], [0, 0, 1, 1], [], []>} : vector<16x128xbf16>, vector<128x32xbf16>, vector<16x32xf32> -> vector<16x32xf32>
    %c0_3 = arith.constant 0 : index
    %c0_4 = arith.constant 0 : index
    %9 = vector.load %arg1[%c0_3, %c0_4] : memref<16x1xi32, #tpu.memory_space<vmem>>, vector<16x1xi32>
    %c0_i32 = arith.constant 0 : i32
    %10 = vector.broadcast %c0_i32 : i32 to vector<16x1xi32>
    %11 = arith.cmpi eq, %9, %10 : vector<16x1xi32>
    %c0_5 = arith.constant 0 : index
    %c0_6 = arith.constant 0 : index
    %12 = vector.load %arg6[%c0_5, %c0_6] : memref<2x32xf32, #tpu.memory_space<vmem>>, vector<1x32xf32>
    %c1 = arith.constant 1 : index
    %c0_7 = arith.constant 0 : index
    %13 = vector.load %arg6[%c1, %c0_7] : memref<2x32xf32, #tpu.memory_space<vmem>>, vector<1x32xf32>
    %14 = vector.shape_cast %11 : vector<16x1xi1> to vector<16x1xi1>
    %15 = vector.broadcast %14 : vector<16x1xi1> to vector<16x32xi1>
    %16 = vector.shape_cast %12 : vector<1x32xf32> to vector<1x32xf32>
    %17 = vector.broadcast %16 : vector<1x32xf32> to vector<16x32xf32>
    %18 = vector.shape_cast %13 : vector<1x32xf32> to vector<1x32xf32>
    %19 = vector.broadcast %18 : vector<1x32xf32> to vector<16x32xf32>
    %20 = arith.select %15, %17, %19 : vector<16x32xi1>, vector<16x32xf32>
    %c0_8 = arith.constant 0 : index
    %c0_9 = arith.constant 0 : index
    %21 = vector.load %arg5[%c0_8, %c0_9] : memref<64x32xf32, #tpu.memory_space<vmem>>, vector<8x32xf32>
    %22 = tpu.concatenate %21, %21 in 0 : vector<8x32xf32>, vector<8x32xf32> -> vector<16x32xf32>
    %23 = arith.addf %8, %20 : vector<16x32xf32>
    %24 = arith.addf %23, %22 : vector<16x32xf32>
    %c0_10 = arith.constant 0 : index
    %c0_11 = arith.constant 0 : index
    %25 = vector.load %arg12[%c0_10, %c0_11] : memref<19x128xf32, #tpu.memory_space<vmem>>, vector<1x32xf32>
    %c1_12 = arith.constant 1 : index
    %c0_13 = arith.constant 0 : index
    %26 = vector.load %arg12[%c1_12, %c0_13] : memref<19x128xf32, #tpu.memory_space<vmem>>, vector<1x32xf32>
    %cst_14 = arith.constant dense<0.000000e+00> : vector<16xf32>
    %27 = vector.multi_reduction <add>, %24, %cst_14 [1] : vector<16x32xf32> to vector<16xf32>
    %28 = vector.shape_cast %27 : vector<16xf32> to vector<16x1xf32>
    %cst_15 = arith.constant 3.200000e+01 : f32
    %29 = vector.broadcast %cst_15 : f32 to vector<16x1xf32>
    %30 = arith.divf %28, %29 : vector<16x1xf32>
    %31 = vector.broadcast %30 : vector<16x1xf32> to vector<16x32xf32>
    %32 = arith.subf %24, %31 : vector<16x32xf32>
    %33 = vector.broadcast %30 : vector<16x1xf32> to vector<16x32xf32>
    %34 = arith.subf %24, %33 : vector<16x32xf32>
    %35 = arith.mulf %32, %34 : vector<16x32xf32>
    %cst_16 = arith.constant dense<0.000000e+00> : vector<16xf32>
    %36 = vector.multi_reduction <add>, %35, %cst_16 [1] : vector<16x32xf32> to vector<16xf32>
    %37 = vector.shape_cast %36 : vector<16xf32> to vector<16x1xf32>
    %cst_17 = arith.constant 3.200000e+01 : f32
    %38 = vector.broadcast %cst_17 : f32 to vector<16x1xf32>
    %39 = arith.divf %37, %38 : vector<16x1xf32>
    %cst_18 = arith.constant 9.99999996E-13 : f32
    %40 = vector.broadcast %cst_18 : f32 to vector<16x1xf32>
    %41 = arith.addf %39, %40 : vector<16x1xf32>
    %42 = math.rsqrt %41 : vector<16x1xf32>
    %43 = vector.broadcast %30 : vector<16x1xf32> to vector<16x32xf32>
    %44 = arith.subf %24, %43 : vector<16x32xf32>
    %45 = vector.broadcast %42 : vector<16x1xf32> to vector<16x32xf32>
    %46 = arith.mulf %44, %45 : vector<16x32xf32>
    %47 = vector.broadcast %25 : vector<1x32xf32> to vector<16x32xf32>
    %48 = arith.mulf %46, %47 : vector<16x32xf32>
    %49 = vector.broadcast %26 : vector<1x32xf32> to vector<16x32xf32>
    %50 = arith.addf %48, %49 : vector<16x32xf32>
    %c0_19 = arith.constant 0 : index
    %c0_20 = arith.constant 0 : index
    %51 = vector.load %arg2[%c0_19, %c0_20] : memref<1x16xi32, #tpu.memory_space<vmem>>, vector<1x16xi32>
    %52 = arith.sitofp %51 : vector<1x16xi32> to vector<1x16xf32>
    %cst_21 = arith.constant 1.000000e+00 : f32
    %53 = vector.broadcast %cst_21 : f32 to vector<1x16xf32>
    %54 = arith.subf %53, %52 : vector<1x16xf32>
    %cst_22 = arith.constant -1.000000e+04 : f32
    %55 = vector.broadcast %cst_22 : f32 to vector<1x16xf32>
    %56 = arith.mulf %54, %55 : vector<1x16xf32>
    %57 = tpu.concatenate %56, %56 in 1 : vector<1x16xf32>, vector<1x16xf32> -> vector<1x32xf32>
    %c0_23 = arith.constant 0 : index
    %c0_24 = arith.constant 0 : index
    %58 = vector.load %arg3[%c0_23, %c0_24] : memref<32x32xf32, #tpu.memory_space<vmem>>, vector<32x32xf32>
    %59 = vector.broadcast %57 : vector<1x32xf32> to vector<32x32xf32>
    %60 = arith.addf %58, %59 : vector<32x32xf32>
    %61 = arith.truncf %50 : vector<16x32xf32> to vector<16x32xbf16>
    %c0_25 = arith.constant 0 : index
    %c0_26 = arith.constant 0 : index
    %c0_27 = arith.constant 0 : index
    %62 = vector.load %arg7[%c0_25, %c0_26, %c0_27] : memref<2x32x96xbf16, #tpu.memory_space<vmem>>, vector<1x32x96xbf16>
    %63 = vector.shape_cast %62 : vector<1x32x96xbf16> to vector<32x96xbf16>
    %cst_28 = arith.constant dense<0.000000e+00> : vector<16x96xf32>
    %64 = tpu.matmul %61, %63, %cst_28 {dimension_numbers = #tpu.dot_dimension_numbers<[1], [0], [0], [1], [0, 0, 1, 1], [], []>} : vector<16x32xbf16>, vector<32x96xbf16>, vector<16x96xf32> -> vector<16x96xf32>
    %c2 = arith.constant 2 : index
    %c0_29 = arith.constant 0 : index
    %65 = vector.load %arg12[%c2, %c0_29] : memref<19x128xf32, #tpu.memory_space<vmem>>, vector<1x96xf32>
    %66 = vector.broadcast %65 : vector<1x96xf32> to vector<16x96xf32>
    %67 = arith.addf %64, %66 : vector<16x96xf32>
    %68 = vector.extract_strided_slice %67 {offsets = [0, 0], sizes = [16, 16], strides = [1, 1]} : vector<16x96xf32> to vector<16x16xf32>
    %69 = vector.extract_strided_slice %67 {offsets = [0, 16], sizes = [16, 16], strides = [1, 1]} : vector<16x96xf32> to vector<16x16xf32>
    %70 = tpu.concatenate %68, %69 in 0 : vector<16x16xf32>, vector<16x16xf32> -> vector<32x16xf32>
    %71 = vector.extract_strided_slice %67 {offsets = [0, 32], sizes = [16, 16], strides = [1, 1]} : vector<16x96xf32> to vector<16x16xf32>
    %72 = vector.extract_strided_slice %67 {offsets = [0, 48], sizes = [16, 16], strides = [1, 1]} : vector<16x96xf32> to vector<16x16xf32>
    %73 = tpu.concatenate %71, %72 in 0 : vector<16x16xf32>, vector<16x16xf32> -> vector<32x16xf32>
    %74 = vector.extract_strided_slice %67 {offsets = [0, 64], sizes = [16, 16], strides = [1, 1]} : vector<16x96xf32> to vector<16x16xf32>
    %75 = vector.extract_strided_slice %67 {offsets = [0, 80], sizes = [16, 16], strides = [1, 1]} : vector<16x96xf32> to vector<16x16xf32>
    %76 = tpu.concatenate %74, %75 in 0 : vector<16x16xf32>, vector<16x16xf32> -> vector<32x16xf32>
    %77 = arith.truncf %70 : vector<32x16xf32> to vector<32x16xbf16>
    %78 = tpu.transpose %73, [1, 0] : vector<32x16xf32> -> vector<16x32xf32>
    %79 = arith.truncf %78 : vector<16x32xf32> to vector<16x32xbf16>
    %cst_30 = arith.constant dense<0.000000e+00> : vector<32x32xf32>
    %80 = tpu.matmul %77, %79, %cst_30 {dimension_numbers = #tpu.dot_dimension_numbers<[1], [0], [0], [1], [0, 0, 1, 1], [], []>} : vector<32x16xbf16>, vector<16x32xbf16>, vector<32x32xf32> -> vector<32x32xf32>
    %cst_31 = arith.constant 2.500000e-01 : f32
    %81 = vector.broadcast %cst_31 : f32 to vector<32x32xf32>
    %82 = arith.mulf %80, %81 : vector<32x32xf32>
    %83 = arith.addf %82, %60 : vector<32x32xf32>
    %cst_32 = arith.constant dense<0xFF800000> : vector<32xf32>
    %84 = vector.multi_reduction <maximumf>, %83, %cst_32 [1] : vector<32x32xf32> to vector<32xf32>
    %85 = vector.shape_cast %84 : vector<32xf32> to vector<32x1xf32>
    %86 = vector.broadcast %85 : vector<32x1xf32> to vector<32x32xf32>
    %87 = arith.subf %83, %86 : vector<32x32xf32>
    %88 = math.exp %87 : vector<32x32xf32>
    %cst_33 = arith.constant dense<0.000000e+00> : vector<32xf32>
    %89 = vector.multi_reduction <add>, %88, %cst_33 [1] : vector<32x32xf32> to vector<32xf32>
    %90 = vector.shape_cast %89 : vector<32xf32> to vector<32x1xf32>
    %91 = tpu.reciprocal %90 {approx = true} : vector<32x1xf32> -> vector<32x1xf32>
    %92 = vector.broadcast %91 : vector<32x1xf32> to vector<32x32xf32>
    %93 = arith.mulf %88, %92 : vector<32x32xf32>
    %94 = arith.truncf %93 : vector<32x32xf32> to vector<32x32xbf16>
    %95 = arith.truncf %76 : vector<32x16xf32> to vector<32x16xbf16>
    %cst_34 = arith.constant dense<0.000000e+00> : vector<32x16xf32>
    %96 = tpu.matmul %94, %95, %cst_34 {dimension_numbers = #tpu.dot_dimension_numbers<[1], [0], [0], [1], [0, 0, 1, 1], [], []>} : vector<32x32xbf16>, vector<32x16xbf16>, vector<32x16xf32> -> vector<32x16xf32>
    %97 = vector.extract_strided_slice %96 {offsets = [0, 0], sizes = [16, 16], strides = [1, 1]} : vector<32x16xf32> to vector<16x16xf32>
    %98 = vector.extract_strided_slice %96 {offsets = [16, 0], sizes = [16, 16], strides = [1, 1]} : vector<32x16xf32> to vector<16x16xf32>
    %99 = tpu.concatenate %97, %98 in 1 : vector<16x16xf32>, vector<16x16xf32> -> vector<16x32xf32>
    %100 = arith.truncf %99 : vector<16x32xf32> to vector<16x32xbf16>
    %c0_35 = arith.constant 0 : index
    %c0_36 = arith.constant 0 : index
    %c0_37 = arith.constant 0 : index
    %101 = vector.load %arg8[%c0_35, %c0_36, %c0_37] : memref<2x32x32xbf16, #tpu.memory_space<vmem>>, vector<1x32x32xbf16>
    %102 = vector.shape_cast %101 : vector<1x32x32xbf16> to vector<32x32xbf16>
    %cst_38 = arith.constant dense<0.000000e+00> : vector<16x32xf32>
    %103 = tpu.matmul %100, %102, %cst_38 {dimension_numbers = #tpu.dot_dimension_numbers<[1], [0], [0], [1], [0, 0, 1, 1], [], []>} : vector<16x32xbf16>, vector<32x32xbf16>, vector<16x32xf32> -> vector<16x32xf32>
    %c3 = arith.constant 3 : index
    %c0_39 = arith.constant 0 : index
    %104 = vector.load %arg12[%c3, %c0_39] : memref<19x128xf32, #tpu.memory_space<vmem>>, vector<1x32xf32>
    %105 = vector.broadcast %104 : vector<1x32xf32> to vector<16x32xf32>
    %106 = arith.addf %103, %105 : vector<16x32xf32>
    %107 = arith.addf %106, %50 : vector<16x32xf32>
    %c4 = arith.constant 4 : index
    %c0_40 = arith.constant 0 : index
    %108 = vector.load %arg12[%c4, %c0_40] : memref<19x128xf32, #tpu.memory_space<vmem>>, vector<1x32xf32>
    %c5 = arith.constant 5 : index
    %c0_41 = arith.constant 0 : index
    %109 = vector.load %arg12[%c5, %c0_41] : memref<19x128xf32, #tpu.memory_space<vmem>>, vector<1x32xf32>
    %cst_42 = arith.constant dense<0.000000e+00> : vector<16xf32>
    %110 = vector.multi_reduction <add>, %107, %cst_42 [1] : vector<16x32xf32> to vector<16xf32>
    %111 = vector.shape_cast %110 : vector<16xf32> to vector<16x1xf32>
    %cst_43 = arith.constant 3.200000e+01 : f32
    %112 = vector.broadcast %cst_43 : f32 to vector<16x1xf32>
    %113 = arith.divf %111, %112 : vector<16x1xf32>
    %114 = vector.broadcast %113 : vector<16x1xf32> to vector<16x32xf32>
    %115 = arith.subf %107, %114 : vector<16x32xf32>
    %116 = vector.broadcast %113 : vector<16x1xf32> to vector<16x32xf32>
    %117 = arith.subf %107, %116 : vector<16x32xf32>
    %118 = arith.mulf %115, %117 : vector<16x32xf32>
    %cst_44 = arith.constant dense<0.000000e+00> : vector<16xf32>
    %119 = vector.multi_reduction <add>, %118, %cst_44 [1] : vector<16x32xf32> to vector<16xf32>
    %120 = vector.shape_cast %119 : vector<16xf32> to vector<16x1xf32>
    %cst_45 = arith.constant 3.200000e+01 : f32
    %121 = vector.broadcast %cst_45 : f32 to vector<16x1xf32>
    %122 = arith.divf %120, %121 : vector<16x1xf32>
    %cst_46 = arith.constant 9.99999996E-13 : f32
    %123 = vector.broadcast %cst_46 : f32 to vector<16x1xf32>
    %124 = arith.addf %122, %123 : vector<16x1xf32>
    %125 = math.rsqrt %124 : vector<16x1xf32>
    %126 = vector.broadcast %113 : vector<16x1xf32> to vector<16x32xf32>
    %127 = arith.subf %107, %126 : vector<16x32xf32>
    %128 = vector.broadcast %125 : vector<16x1xf32> to vector<16x32xf32>
    %129 = arith.mulf %127, %128 : vector<16x32xf32>
    %130 = vector.broadcast %108 : vector<1x32xf32> to vector<16x32xf32>
    %131 = arith.mulf %129, %130 : vector<16x32xf32>
    %132 = vector.broadcast %109 : vector<1x32xf32> to vector<16x32xf32>
    %133 = arith.addf %131, %132 : vector<16x32xf32>
    %134 = arith.truncf %133 : vector<16x32xf32> to vector<16x32xbf16>
    %c0_47 = arith.constant 0 : index
    %c0_48 = arith.constant 0 : index
    %c0_49 = arith.constant 0 : index
    %135 = vector.load %arg9[%c0_47, %c0_48, %c0_49] : memref<2x32x64xbf16, #tpu.memory_space<vmem>>, vector<1x32x64xbf16>
    %136 = vector.shape_cast %135 : vector<1x32x64xbf16> to vector<32x64xbf16>
    %cst_50 = arith.constant dense<0.000000e+00> : vector<16x64xf32>
    %137 = tpu.matmul %134, %136, %cst_50 {dimension_numbers = #tpu.dot_dimension_numbers<[1], [0], [0], [1], [0, 0, 1, 1], [], []>} : vector<16x32xbf16>, vector<32x64xbf16>, vector<16x64xf32> -> vector<16x64xf32>
    %c6 = arith.constant 6 : index
    %c0_51 = arith.constant 0 : index
    %138 = vector.load %arg12[%c6, %c0_51] : memref<19x128xf32, #tpu.memory_space<vmem>>, vector<1x64xf32>
    %139 = vector.broadcast %138 : vector<1x64xf32> to vector<16x64xf32>
    %140 = arith.addf %137, %139 : vector<16x64xf32>
    %cst_52 = arith.constant 5.000000e-01 : f32
    %141 = vector.broadcast %cst_52 : f32 to vector<16x64xf32>
    %142 = arith.mulf %141, %140 : vector<16x64xf32>
    %cst_53 = arith.constant 0.707106769 : f32
    %143 = vector.broadcast %cst_53 : f32 to vector<16x64xf32>
    %144 = arith.mulf %140, %143 : vector<16x64xf32>
    %145 = math.erf %144 : vector<16x64xf32>
    %cst_54 = arith.constant 1.000000e+00 : f32
    %146 = vector.broadcast %cst_54 : f32 to vector<16x64xf32>
    %147 = arith.addf %146, %145 : vector<16x64xf32>
    %148 = arith.mulf %142, %147 : vector<16x64xf32>
    %149 = arith.truncf %148 : vector<16x64xf32> to vector<16x64xbf16>
    %c0_55 = arith.constant 0 : index
    %c0_56 = arith.constant 0 : index
    %c0_57 = arith.constant 0 : index
    %150 = vector.load %arg10[%c0_55, %c0_56, %c0_57] : memref<2x64x32xbf16, #tpu.memory_space<vmem>>, vector<1x64x32xbf16>
    %151 = vector.shape_cast %150 : vector<1x64x32xbf16> to vector<64x32xbf16>
    %cst_58 = arith.constant dense<0.000000e+00> : vector<16x32xf32>
    %152 = tpu.matmul %149, %151, %cst_58 {dimension_numbers = #tpu.dot_dimension_numbers<[1], [0], [0], [1], [0, 0, 1, 1], [], []>} : vector<16x64xbf16>, vector<64x32xbf16>, vector<16x32xf32> -> vector<16x32xf32>
    %c7 = arith.constant 7 : index
    %c0_59 = arith.constant 0 : index
    %153 = vector.load %arg12[%c7, %c0_59] : memref<19x128xf32, #tpu.memory_space<vmem>>, vector<1x32xf32>
    %154 = vector.broadcast %153 : vector<1x32xf32> to vector<16x32xf32>
    %155 = arith.addf %152, %154 : vector<16x32xf32>
    %156 = arith.addf %155, %133 : vector<16x32xf32>
    %c8 = arith.constant 8 : index
    %c0_60 = arith.constant 0 : index
    %157 = vector.load %arg12[%c8, %c0_60] : memref<19x128xf32, #tpu.memory_space<vmem>>, vector<1x32xf32>
    %c9 = arith.constant 9 : index
    %c0_61 = arith.constant 0 : index
    %158 = vector.load %arg12[%c9, %c0_61] : memref<19x128xf32, #tpu.memory_space<vmem>>, vector<1x32xf32>
    %cst_62 = arith.constant dense<0.000000e+00> : vector<16xf32>
    %159 = vector.multi_reduction <add>, %156, %cst_62 [1] : vector<16x32xf32> to vector<16xf32>
    %160 = vector.shape_cast %159 : vector<16xf32> to vector<16x1xf32>
    %cst_63 = arith.constant 3.200000e+01 : f32
    %161 = vector.broadcast %cst_63 : f32 to vector<16x1xf32>
    %162 = arith.divf %160, %161 : vector<16x1xf32>
    %163 = vector.broadcast %162 : vector<16x1xf32> to vector<16x32xf32>
    %164 = arith.subf %156, %163 : vector<16x32xf32>
    %165 = vector.broadcast %162 : vector<16x1xf32> to vector<16x32xf32>
    %166 = arith.subf %156, %165 : vector<16x32xf32>
    %167 = arith.mulf %164, %166 : vector<16x32xf32>
    %cst_64 = arith.constant dense<0.000000e+00> : vector<16xf32>
    %168 = vector.multi_reduction <add>, %167, %cst_64 [1] : vector<16x32xf32> to vector<16xf32>
    %169 = vector.shape_cast %168 : vector<16xf32> to vector<16x1xf32>
    %cst_65 = arith.constant 3.200000e+01 : f32
    %170 = vector.broadcast %cst_65 : f32 to vector<16x1xf32>
    %171 = arith.divf %169, %170 : vector<16x1xf32>
    %cst_66 = arith.constant 9.99999996E-13 : f32
    %172 = vector.broadcast %cst_66 : f32 to vector<16x1xf32>
    %173 = arith.addf %171, %172 : vector<16x1xf32>
    %174 = math.rsqrt %173 : vector<16x1xf32>
    %175 = vector.broadcast %162 : vector<16x1xf32> to vector<16x32xf32>
    %176 = arith.subf %156, %175 : vector<16x32xf32>
    %177 = vector.broadcast %174 : vector<16x1xf32> to vector<16x32xf32>
    %178 = arith.mulf %176, %177 : vector<16x32xf32>
    %179 = vector.broadcast %157 : vector<1x32xf32> to vector<16x32xf32>
    %180 = arith.mulf %178, %179 : vector<16x32xf32>
    %181 = vector.broadcast %158 : vector<1x32xf32> to vector<16x32xf32>
    %182 = arith.addf %180, %181 : vector<16x32xf32>
    %183 = arith.truncf %182 : vector<16x32xf32> to vector<16x32xbf16>
    %c1_67 = arith.constant 1 : index
    %c0_68 = arith.constant 0 : index
    %c0_69 = arith.constant 0 : index
    %184 = vector.load %arg7[%c1_67, %c0_68, %c0_69] : memref<2x32x96xbf16, #tpu.memory_space<vmem>>, vector<1x32x96xbf16>
    %185 = vector.shape_cast %184 : vector<1x32x96xbf16> to vector<32x96xbf16>
    %cst_70 = arith.constant dense<0.000000e+00> : vector<16x96xf32>
    %186 = tpu.matmul %183, %185, %cst_70 {dimension_numbers = #tpu.dot_dimension_numbers<[1], [0], [0], [1], [0, 0, 1, 1], [], []>} : vector<16x32xbf16>, vector<32x96xbf16>, vector<16x96xf32> -> vector<16x96xf32>
    %c10 = arith.constant 10 : index
    %c0_71 = arith.constant 0 : index
    %187 = vector.load %arg12[%c10, %c0_71] : memref<19x128xf32, #tpu.memory_space<vmem>>, vector<1x96xf32>
    %188 = vector.broadcast %187 : vector<1x96xf32> to vector<16x96xf32>
    %189 = arith.addf %186, %188 : vector<16x96xf32>
    %190 = vector.extract_strided_slice %189 {offsets = [0, 0], sizes = [16, 16], strides = [1, 1]} : vector<16x96xf32> to vector<16x16xf32>
    %191 = vector.extract_strided_slice %189 {offsets = [0, 16], sizes = [16, 16], strides = [1, 1]} : vector<16x96xf32> to vector<16x16xf32>
    %192 = tpu.concatenate %190, %191 in 0 : vector<16x16xf32>, vector<16x16xf32> -> vector<32x16xf32>
    %193 = vector.extract_strided_slice %189 {offsets = [0, 32], sizes = [16, 16], strides = [1, 1]} : vector<16x96xf32> to vector<16x16xf32>
    %194 = vector.extract_strided_slice %189 {offsets = [0, 48], sizes = [16, 16], strides = [1, 1]} : vector<16x96xf32> to vector<16x16xf32>
    %195 = tpu.concatenate %193, %194 in 0 : vector<16x16xf32>, vector<16x16xf32> -> vector<32x16xf32>
    %196 = vector.extract_strided_slice %189 {offsets = [0, 64], sizes = [16, 16], strides = [1, 1]} : vector<16x96xf32> to vector<16x16xf32>
    %197 = vector.extract_strided_slice %189 {offsets = [0, 80], sizes = [16, 16], strides = [1, 1]} : vector<16x96xf32> to vector<16x16xf32>
    %198 = tpu.concatenate %196, %197 in 0 : vector<16x16xf32>, vector<16x16xf32> -> vector<32x16xf32>
    %199 = arith.truncf %192 : vector<32x16xf32> to vector<32x16xbf16>
    %200 = tpu.transpose %195, [1, 0] : vector<32x16xf32> -> vector<16x32xf32>
    %201 = arith.truncf %200 : vector<16x32xf32> to vector<16x32xbf16>
    %cst_72 = arith.constant dense<0.000000e+00> : vector<32x32xf32>
    %202 = tpu.matmul %199, %201, %cst_72 {dimension_numbers = #tpu.dot_dimension_numbers<[1], [0], [0], [1], [0, 0, 1, 1], [], []>} : vector<32x16xbf16>, vector<16x32xbf16>, vector<32x32xf32> -> vector<32x32xf32>
    %cst_73 = arith.constant 2.500000e-01 : f32
    %203 = vector.broadcast %cst_73 : f32 to vector<32x32xf32>
    %204 = arith.mulf %202, %203 : vector<32x32xf32>
    %205 = arith.addf %204, %60 : vector<32x32xf32>
    %cst_74 = arith.constant dense<0xFF800000> : vector<32xf32>
    %206 = vector.multi_reduction <maximumf>, %205, %cst_74 [1] : vector<32x32xf32> to vector<32xf32>
    %207 = vector.shape_cast %206 : vector<32xf32> to vector<32x1xf32>
    %208 = vector.broadcast %207 : vector<32x1xf32> to vector<32x32xf32>
    %209 = arith.subf %205, %208 : vector<32x32xf32>
    %210 = math.exp %209 : vector<32x32xf32>
    %cst_75 = arith.constant dense<0.000000e+00> : vector<32xf32>
    %211 = vector.multi_reduction <add>, %210, %cst_75 [1] : vector<32x32xf32> to vector<32xf32>
    %212 = vector.shape_cast %211 : vector<32xf32> to vector<32x1xf32>
    %213 = tpu.reciprocal %212 {approx = true} : vector<32x1xf32> -> vector<32x1xf32>
    %214 = vector.broadcast %213 : vector<32x1xf32> to vector<32x32xf32>
    %215 = arith.mulf %210, %214 : vector<32x32xf32>
    %216 = arith.truncf %215 : vector<32x32xf32> to vector<32x32xbf16>
    %217 = arith.truncf %198 : vector<32x16xf32> to vector<32x16xbf16>
    %cst_76 = arith.constant dense<0.000000e+00> : vector<32x16xf32>
    %218 = tpu.matmul %216, %217, %cst_76 {dimension_numbers = #tpu.dot_dimension_numbers<[1], [0], [0], [1], [0, 0, 1, 1], [], []>} : vector<32x32xbf16>, vector<32x16xbf16>, vector<32x16xf32> -> vector<32x16xf32>
    %219 = vector.extract_strided_slice %218 {offsets = [0, 0], sizes = [16, 16], strides = [1, 1]} : vector<32x16xf32> to vector<16x16xf32>
    %220 = vector.extract_strided_slice %218 {offsets = [16, 0], sizes = [16, 16], strides = [1, 1]} : vector<32x16xf32> to vector<16x16xf32>
    %221 = tpu.concatenate %219, %220 in 1 : vector<16x16xf32>, vector<16x16xf32> -> vector<16x32xf32>
    %222 = arith.truncf %221 : vector<16x32xf32> to vector<16x32xbf16>
    %c1_77 = arith.constant 1 : index
    %c0_78 = arith.constant 0 : index
    %c0_79 = arith.constant 0 : index
    %223 = vector.load %arg8[%c1_77, %c0_78, %c0_79] : memref<2x32x32xbf16, #tpu.memory_space<vmem>>, vector<1x32x32xbf16>
    %224 = vector.shape_cast %223 : vector<1x32x32xbf16> to vector<32x32xbf16>
    %cst_80 = arith.constant dense<0.000000e+00> : vector<16x32xf32>
    %225 = tpu.matmul %222, %224, %cst_80 {dimension_numbers = #tpu.dot_dimension_numbers<[1], [0], [0], [1], [0, 0, 1, 1], [], []>} : vector<16x32xbf16>, vector<32x32xbf16>, vector<16x32xf32> -> vector<16x32xf32>
    %c11 = arith.constant 11 : index
    %c0_81 = arith.constant 0 : index
    %226 = vector.load %arg12[%c11, %c0_81] : memref<19x128xf32, #tpu.memory_space<vmem>>, vector<1x32xf32>
    %227 = vector.broadcast %226 : vector<1x32xf32> to vector<16x32xf32>
    %228 = arith.addf %225, %227 : vector<16x32xf32>
    %229 = arith.addf %228, %182 : vector<16x32xf32>
    %c12 = arith.constant 12 : index
    %c0_82 = arith.constant 0 : index
    %230 = vector.load %arg12[%c12, %c0_82] : memref<19x128xf32, #tpu.memory_space<vmem>>, vector<1x32xf32>
    %c13 = arith.constant 13 : index
    %c0_83 = arith.constant 0 : index
    %231 = vector.load %arg12[%c13, %c0_83] : memref<19x128xf32, #tpu.memory_space<vmem>>, vector<1x32xf32>
    %cst_84 = arith.constant dense<0.000000e+00> : vector<16xf32>
    %232 = vector.multi_reduction <add>, %229, %cst_84 [1] : vector<16x32xf32> to vector<16xf32>
    %233 = vector.shape_cast %232 : vector<16xf32> to vector<16x1xf32>
    %cst_85 = arith.constant 3.200000e+01 : f32
    %234 = vector.broadcast %cst_85 : f32 to vector<16x1xf32>
    %235 = arith.divf %233, %234 : vector<16x1xf32>
    %236 = vector.broadcast %235 : vector<16x1xf32> to vector<16x32xf32>
    %237 = arith.subf %229, %236 : vector<16x32xf32>
    %238 = vector.broadcast %235 : vector<16x1xf32> to vector<16x32xf32>
    %239 = arith.subf %229, %238 : vector<16x32xf32>
    %240 = arith.mulf %237, %239 : vector<16x32xf32>
    %cst_86 = arith.constant dense<0.000000e+00> : vector<16xf32>
    %241 = vector.multi_reduction <add>, %240, %cst_86 [1] : vector<16x32xf32> to vector<16xf32>
    %242 = vector.shape_cast %241 : vector<16xf32> to vector<16x1xf32>
    %cst_87 = arith.constant 3.200000e+01 : f32
    %243 = vector.broadcast %cst_87 : f32 to vector<16x1xf32>
    %244 = arith.divf %242, %243 : vector<16x1xf32>
    %cst_88 = arith.constant 9.99999996E-13 : f32
    %245 = vector.broadcast %cst_88 : f32 to vector<16x1xf32>
    %246 = arith.addf %244, %245 : vector<16x1xf32>
    %247 = math.rsqrt %246 : vector<16x1xf32>
    %248 = vector.broadcast %235 : vector<16x1xf32> to vector<16x32xf32>
    %249 = arith.subf %229, %248 : vector<16x32xf32>
    %250 = vector.broadcast %247 : vector<16x1xf32> to vector<16x32xf32>
    %251 = arith.mulf %249, %250 : vector<16x32xf32>
    %252 = vector.broadcast %230 : vector<1x32xf32> to vector<16x32xf32>
    %253 = arith.mulf %251, %252 : vector<16x32xf32>
    %254 = vector.broadcast %231 : vector<1x32xf32> to vector<16x32xf32>
    %255 = arith.addf %253, %254 : vector<16x32xf32>
    %256 = arith.truncf %255 : vector<16x32xf32> to vector<16x32xbf16>
    %c1_89 = arith.constant 1 : index
    %c0_90 = arith.constant 0 : index
    %c0_91 = arith.constant 0 : index
    %257 = vector.load %arg9[%c1_89, %c0_90, %c0_91] : memref<2x32x64xbf16, #tpu.memory_space<vmem>>, vector<1x32x64xbf16>
    %258 = vector.shape_cast %257 : vector<1x32x64xbf16> to vector<32x64xbf16>
    %cst_92 = arith.constant dense<0.000000e+00> : vector<16x64xf32>
    %259 = tpu.matmul %256, %258, %cst_92 {dimension_numbers = #tpu.dot_dimension_numbers<[1], [0], [0], [1], [0, 0, 1, 1], [], []>} : vector<16x32xbf16>, vector<32x64xbf16>, vector<16x64xf32> -> vector<16x64xf32>
    %c14 = arith.constant 14 : index
    %c0_93 = arith.constant 0 : index
    %260 = vector.load %arg12[%c14, %c0_93] : memref<19x128xf32, #tpu.memory_space<vmem>>, vector<1x64xf32>
    %261 = vector.broadcast %260 : vector<1x64xf32> to vector<16x64xf32>
    %262 = arith.addf %259, %261 : vector<16x64xf32>
    %cst_94 = arith.constant 5.000000e-01 : f32
    %263 = vector.broadcast %cst_94 : f32 to vector<16x64xf32>
    %264 = arith.mulf %263, %262 : vector<16x64xf32>
    %cst_95 = arith.constant 0.707106769 : f32
    %265 = vector.broadcast %cst_95 : f32 to vector<16x64xf32>
    %266 = arith.mulf %262, %265 : vector<16x64xf32>
    %267 = math.erf %266 : vector<16x64xf32>
    %cst_96 = arith.constant 1.000000e+00 : f32
    %268 = vector.broadcast %cst_96 : f32 to vector<16x64xf32>
    %269 = arith.addf %268, %267 : vector<16x64xf32>
    %270 = arith.mulf %264, %269 : vector<16x64xf32>
    %271 = arith.truncf %270 : vector<16x64xf32> to vector<16x64xbf16>
    %c1_97 = arith.constant 1 : index
    %c0_98 = arith.constant 0 : index
    %c0_99 = arith.constant 0 : index
    %272 = vector.load %arg10[%c1_97, %c0_98, %c0_99] : memref<2x64x32xbf16, #tpu.memory_space<vmem>>, vector<1x64x32xbf16>
    %273 = vector.shape_cast %272 : vector<1x64x32xbf16> to vector<64x32xbf16>
    %cst_100 = arith.constant dense<0.000000e+00> : vector<16x32xf32>
    %274 = tpu.matmul %271, %273, %cst_100 {dimension_numbers = #tpu.dot_dimension_numbers<[1], [0], [0], [1], [0, 0, 1, 1], [], []>} : vector<16x64xbf16>, vector<64x32xbf16>, vector<16x32xf32> -> vector<16x32xf32>
    %c15 = arith.constant 15 : index
    %c0_101 = arith.constant 0 : index
    %275 = vector.load %arg12[%c15, %c0_101] : memref<19x128xf32, #tpu.memory_space<vmem>>, vector<1x32xf32>
    %276 = vector.broadcast %275 : vector<1x32xf32> to vector<16x32xf32>
    %277 = arith.addf %274, %276 : vector<16x32xf32>
    %278 = arith.addf %277, %255 : vector<16x32xf32>
    %c16 = arith.constant 16 : index
    %c0_102 = arith.constant 0 : index
    %279 = vector.load %arg12[%c16, %c0_102] : memref<19x128xf32, #tpu.memory_space<vmem>>, vector<1x32xf32>
    %c17 = arith.constant 17 : index
    %c0_103 = arith.constant 0 : index
    %280 = vector.load %arg12[%c17, %c0_103] : memref<19x128xf32, #tpu.memory_space<vmem>>, vector<1x32xf32>
    %cst_104 = arith.constant dense<0.000000e+00> : vector<16xf32>
    %281 = vector.multi_reduction <add>, %278, %cst_104 [1] : vector<16x32xf32> to vector<16xf32>
    %282 = vector.shape_cast %281 : vector<16xf32> to vector<16x1xf32>
    %cst_105 = arith.constant 3.200000e+01 : f32
    %283 = vector.broadcast %cst_105 : f32 to vector<16x1xf32>
    %284 = arith.divf %282, %283 : vector<16x1xf32>
    %285 = vector.broadcast %284 : vector<16x1xf32> to vector<16x32xf32>
    %286 = arith.subf %278, %285 : vector<16x32xf32>
    %287 = vector.broadcast %284 : vector<16x1xf32> to vector<16x32xf32>
    %288 = arith.subf %278, %287 : vector<16x32xf32>
    %289 = arith.mulf %286, %288 : vector<16x32xf32>
    %cst_106 = arith.constant dense<0.000000e+00> : vector<16xf32>
    %290 = vector.multi_reduction <add>, %289, %cst_106 [1] : vector<16x32xf32> to vector<16xf32>
    %291 = vector.shape_cast %290 : vector<16xf32> to vector<16x1xf32>
    %cst_107 = arith.constant 3.200000e+01 : f32
    %292 = vector.broadcast %cst_107 : f32 to vector<16x1xf32>
    %293 = arith.divf %291, %292 : vector<16x1xf32>
    %cst_108 = arith.constant 9.99999996E-13 : f32
    %294 = vector.broadcast %cst_108 : f32 to vector<16x1xf32>
    %295 = arith.addf %293, %294 : vector<16x1xf32>
    %296 = math.rsqrt %295 : vector<16x1xf32>
    %297 = vector.broadcast %284 : vector<16x1xf32> to vector<16x32xf32>
    %298 = arith.subf %278, %297 : vector<16x32xf32>
    %299 = vector.broadcast %296 : vector<16x1xf32> to vector<16x32xf32>
    %300 = arith.mulf %298, %299 : vector<16x32xf32>
    %301 = vector.broadcast %279 : vector<1x32xf32> to vector<16x32xf32>
    %302 = arith.mulf %300, %301 : vector<16x32xf32>
    %303 = vector.broadcast %280 : vector<1x32xf32> to vector<16x32xf32>
    %304 = arith.addf %302, %303 : vector<16x32xf32>
    %305 = arith.truncf %304 : vector<16x32xf32> to vector<16x32xbf16>
    %c0_109 = arith.constant 0 : index
    %c0_110 = arith.constant 0 : index
    %306 = vector.load %arg11[%c0_109, %c0_110] : memref<32x128xbf16, #tpu.memory_space<vmem>>, vector<32x128xbf16>
    %cst_111 = arith.constant dense<0.000000e+00> : vector<16x128xf32>
    %307 = tpu.matmul %305, %306, %cst_111 {dimension_numbers = #tpu.dot_dimension_numbers<[1], [0], [0], [1], [0, 0, 1, 1], [], []>} : vector<16x32xbf16>, vector<32x128xbf16>, vector<16x128xf32> -> vector<16x128xf32>
    %c18 = arith.constant 18 : index
    %c0_112 = arith.constant 0 : index
    %308 = vector.load %arg12[%c18, %c0_112] : memref<19x128xf32, #tpu.memory_space<vmem>>, vector<1x128xf32>
    %309 = vector.broadcast %308 : vector<1x128xf32> to vector<16x128xf32>
    %310 = arith.addf %307, %309 : vector<16x128xf32>
    %c0_113 = arith.constant 0 : index
    %c0_114 = arith.constant 0 : index
    %311 = vector.load %arg13[%c0_113, %c0_114] : memref<16x128xf32, #tpu.memory_space<vmem>>, vector<16x128xf32>
    tpu.vector_store %arg13[%c0_113, %c0_114], %310 {strides = array<i32>} : memref<16x128xf32, #tpu.memory_space<vmem>>, vector<16x128xf32>,
    return
  }
}

</mosaic_0001>

<llo_original>
// kernel: model_forward.1
$region0: #{model_forward.1}
  #allocation0 [shape = 'u32[]', space=smem, size = 0x4, offset = 0x4, fixed_abs, tag = 'smem constant byte address 0x4 - core index']
  #allocation1 [shape = 'u32[144,128]{1,0:T(1,128)}', space=vmem, size = 0x12000, scoped, tag = 'internal scratch']
  %s0 = inlined_call_operand.vmem [shape: s32[16,1], index: 0, kind: input, shape index: {}]
  %s1 = inlined_call_operand.vmem [shape: s32[16,1], index: 1, kind: input, shape index: {}]
  %s2 = inlined_call_operand.vmem [shape: s32[1,16], index: 2, kind: input, shape index: {}]
  %s3 = inlined_call_operand.vmem [shape: f32[32,32], index: 3, kind: input, shape index: {}]
  %s4 = inlined_call_operand.vmem [shape: bf16[128,32], index: 4, kind: input, shape index: {}]
  %s5 = inlined_call_operand.vmem [shape: f32[64,32], index: 5, kind: input, shape index: {}]
  %s6 = inlined_call_operand.vmem [shape: f32[2,32], index: 6, kind: input, shape index: {}]
  %s7 = inlined_call_operand.vmem [shape: bf16[2,32,96], index: 7, kind: input, shape index: {}]
  %s8 = inlined_call_operand.vmem [shape: bf16[2,32,32], index: 8, kind: input, shape index: {}]
  %s9 = inlined_call_operand.vmem [shape: bf16[2,32,64], index: 9, kind: input, shape index: {}]
  %s10 = inlined_call_operand.vmem [shape: bf16[2,64,32], index: 10, kind: input, shape index: {}]
  %s11 = inlined_call_operand.vmem [shape: bf16[32,128], index: 11, kind: input, shape index: {}]
  %s12 = inlined_call_operand.vmem [shape: f32[19,128], index: 12, kind: input, shape index: {}]
  %s13 = inlined_call_operand.vmem [shape: f32[16,128], index: 13, kind: output, shape index: {}]
  %s14 = sld [smem:[#allocation0]]
  $region62: #{model_forward.1} parent=0
    _
  %s16 = ssub.s32 1, %s14
  %s17 = scalar_select 0, %s16, %s14
  // Predicated region
  $region2: #{model_forward.1} parent=0 // pred_check
    _
  $region3: #{model_forward.1} parent=0 // pred_check_branch
    %19 = sbr.rel (0) target = $region5
  $region4: #{model_forward.1} parent=0 // pred_region
    _
  $region5: #{model_forward.1} parent=0 // pred_fallthru
    _
  // Predicated region
  $region6: #{model_forward.1} parent=0 // pred_check
    _
  $region7: #{model_forward.1} parent=0 // pred_check_branch
    %21 = sbr.rel (0) target = $region9
  $region8: #{model_forward.1} parent=0 // pred_region
    _
  $region9: #{model_forward.1} parent=0 // pred_fallthru
    _
  // Predicated region
  $region10: #{model_forward.1} parent=0 // pred_check
    _
  $region11: #{model_forward.1} parent=0 // pred_check_branch
    %23 = sbr.rel (0) target = $region13
  $region12: #{model_forward.1} parent=0 // pred_region
    _
  $region13: #{model_forward.1} parent=0 // pred_fallthru
    _
  // Predicated region
  $region14: #{model_forward.1} parent=0 // pred_check
    _
  $region15: #{model_forward.1} parent=0 // pred_check_branch
    %25 = sbr.rel (0) target = $region17
  $region16: #{model_forward.1} parent=0 // pred_region
    _
  $region17: #{model_forward.1} parent=0 // pred_fallthru
    _
  // Predicated region
  $region18: #{model_forward.1} parent=0 // pred_check
    _
  $region19: #{model_forward.1} parent=0 // pred_check_branch
    %27 = sbr.rel (0) target = $region21
  $region20: #{model_forward.1} parent=0 // pred_region
    _
  $region21: #{model_forward.1} parent=0 // pred_fallthru
    _
  // Predicated region
  $region22: #{model_forward.1} parent=0 // pred_check
    _
  $region23: #{model_forward.1} parent=0 // pred_check_branch
    %29 = sbr.rel (0) target = $region25
  $region24: #{model_forward.1} parent=0 // pred_region
    _
  $region25: #{model_forward.1} parent=0 // pred_fallthru
    _
  // Predicated region
  $region26: #{model_forward.1} parent=0 // pred_check
    _
  $region27: #{model_forward.1} parent=0 // pred_check_branch
    %31 = sbr.rel (0) target = $region29
  $region28: #{model_forward.1} parent=0 // pred_region
    _
  $region29: #{model_forward.1} parent=0 // pred_fallthru
    _
  // Predicated region
  $region30: #{model_forward.1} parent=0 // pred_check
    _
  $region31: #{model_forward.1} parent=0 // pred_check_branch
    %33 = sbr.rel (0) target = $region33
  $region32: #{model_forward.1} parent=0 // pred_region
    _
  $region33: #{model_forward.1} parent=0 // pred_fallthru
    _
  // Predicated region
  $region34: #{model_forward.1} parent=0 // pred_check
    _
  $region35: #{model_forward.1} parent=0 // pred_check_branch
    %35 = sbr.rel (0) target = $region37
  $region36: #{model_forward.1} parent=0 // pred_region
    _
  $region37: #{model_forward.1} parent=0 // pred_fallthru
    _
  // Predicated region
  $region38: #{model_forward.1} parent=0 // pred_check
    _
  $region39: #{model_forward.1} parent=0 // pred_check_branch
    %37 = sbr.rel (0) target = $region41
  $region40: #{model_forward.1} parent=0 // pred_region
    _
  $region41: #{model_forward.1} parent=0 // pred_fallthru
    _
  // Predicated region
  $region42: #{model_forward.1} parent=0 // pred_check
    _
  $region43: #{model_forward.1} parent=0 // pred_check_branch
    %39 = sbr.rel (0) target = $region45
  $region44: #{model_forward.1} parent=0 // pred_region
    _
  $region45: #{model_forward.1} parent=0 // pred_fallthru
    _
  // Predicated region
  $region46: #{model_forward.1} parent=0 // pred_check
    _
  $region47: #{model_forward.1} parent=0 // pred_check_branch
    %41 = sbr.rel (0) target = $region49
  $region48: #{model_forward.1} parent=0 // pred_region
    _
  $region49: #{model_forward.1} parent=0 // pred_fallthru
    _
  // Predicated region
  $region50: #{model_forward.1} parent=0 // pred_check
    _
  $region51: #{model_forward.1} parent=0 // pred_check_branch
    %43 = sbr.rel (0) target = $region53
  $region52: #{model_forward.1} parent=0 // pred_region
    _
  $region53: #{model_forward.1} parent=0 // pred_fallthru
    _
  %v45 = vld [vmem:[%s0] sm:$0xff]
  %v46 = vld [vmem:[%s0 + $0x8] sm:$0xff]
  %v47 = vlaneseq
  %v48 = vand.u32 %v47, 127
  %49 = vset.pattern.permute.xlu0 0
  %50 = vperm.xlu0 %49, %v45
  %v51 = vpop.permute.xlu0 %50
  %52 = vset.pattern.permute.xlu0 0
  %53 = vperm.xlu0 %52, %v46
  %v54 = vpop.permute.xlu0 %53
  %vm55 = vcmp.eq.s32.totalorder %v48, %v51
  %vm56 = vcmp.eq.s32.totalorder %v48, %v54
  %v57 = vsel %vm55, 1, 0
  %v58 = vsel %vm56, 1, 0
  %v59 = vcvt.s32.f32 %v57
  %v60 = vcvt.s32.f32 %v58
  %v61 = vpack.c.bf16 %v60, %v59
  %v62 = vld [vmem:[%s4] sm:$0xf]
  %v63 = vld [vmem:[%s4 + $0x4] sm:$0xf]
  %v64 = vld [vmem:[%s4 + $0x8] sm:$0xf]
  %v65 = vld [vmem:[%s4 + $0xc] sm:$0xf]
  %v66 = vld [vmem:[%s4 + $0x10] sm:$0xf]
  %v67 = vld [vmem:[%s4 + $0x14] sm:$0xf]
  %v68 = vld [vmem:[%s4 + $0x18] sm:$0xf]
  %v69 = vld [vmem:[%s4 + $0x1c] sm:$0xf]
  %v70 = vld [vmem:[%s4 + $0x20] sm:$0xf]
  %v71 = vld [vmem:[%s4 + $0x24] sm:$0xf]
  %v72 = vld [vmem:[%s4 + $0x28] sm:$0xf]
  %v73 = vld [vmem:[%s4 + $0x2c] sm:$0xf]
  %v74 = vld [vmem:[%s4 + $0x30] sm:$0xf]
  %v75 = vld [vmem:[%s4 + $0x34] sm:$0xf]
  %v76 = vld [vmem:[%s4 + $0x38] sm:$0xf]
  %v77 = vld [vmem:[%s4 + $0x3c] sm:$0xf]
  %v78 = vld [vmem:[%s1] sm:$0xff]
  %v79 = vld [vmem:[%s1 + $0x8] sm:$0xff]
  %vm80 = vcmp.eq.s32.totalorder %v78, 0
  %vm81 = vcmp.eq.s32.totalorder %v79, 0
  %v82 = vld [vmem:[%s6] sm:$0x1]
  %v83 = vld [vmem:[%s6 + $0x1] sm:$0x1]
  %v84 = vsel %vm80, 1, 0
  %v85 = vsel %vm81, 1, 0
  %86 = vset.pattern.permute.xlu0 0
  %87 = vperm.xlu0 %86, %v84
  %v88 = vpop.permute.xlu0 %87
  %89 = vset.pattern.permute.xlu0 0
  %90 = vperm.xlu0 %89, %v85
  %v91 = vpop.permute.xlu0 %90
  %vm92 = vcmp.eq.s32.totalorder %v88, 1
  %vm93 = vcmp.eq.s32.totalorder %v91, 1
  %v94 = vlaneseq
  %v95 = vshrl.u32 %v94, 7
  %v96 = vsub.s32 0, %v95
  %v97 = vrot.slane %v82, %v96
  %v98 = vlaneseq
  %v99 = vshrl.u32 %v98, 7
  %v100 = vsub.s32 0, %v99
  %v101 = vrot.slane %v83, %v100
  %v102 = vsel %vm92, %v97, %v101
  %v103 = vsel %vm93, %v97, %v101
  %v104 = vld [vmem:[%s5] sm:$0xff]
  %v121 = vunpack.c.l.b16 %v62
  %v122 = vunpack.c.l.b16 %v63
  %v123 = vunpack.c.l.b16 %v64
  %v124 = vunpack.c.l.b16 %v65
  %v125 = vunpack.c.l.b16 %v66
  %v126 = vunpack.c.l.b16 %v67
  %v127 = vunpack.c.l.b16 %v68
  %v128 = vunpack.c.l.b16 %v69
  %v129 = vunpack.c.l.b16 %v70
  %v130 = vunpack.c.l.b16 %v71
  %v131 = vunpack.c.l.b16 %v72
  %v132 = vunpack.c.l.b16 %v73
  %v133 = vunpack.c.l.b16 %v74
  %v134 = vunpack.c.l.b16 %v75
  %v135 = vunpack.c.l.b16 %v76
  %v136 = vunpack.c.l.b16 %v77
  %v137 = vpack.c.b16 %v122, %v121
  %v138 = vpack.c.b16 %v124, %v123
  %v139 = vpack.c.b16 %v126, %v125
  %v140 = vpack.c.b16 %v128, %v127
  %v141 = vpack.c.b16 %v130, %v129
  %v142 = vpack.c.b16 %v132, %v131
  %v143 = vpack.c.b16 %v134, %v133
  %v144 = vpack.c.b16 %v136, %v135
  %153 = vmatprep.subr.bf16.mxu0 0
  %154 = vmatpush1.bf16.msra.mxu0 %v137
  %155 = vmatprep.subr.bf16.mxu0 0
  %156 = vmatpush1.bf16.msra.mxu0 %v138
  %157 = vmatprep.subr.bf16.mxu0 0
  %158 = vmatpush1.bf16.msra.mxu0 %v139
  %159 = vmatprep.subr.bf16.mxu0 0
  %160 = vmatpush1.bf16.msra.mxu0 %v140
  %161 = vmatprep.subr.bf16.mxu0 0
  %162 = vmatpush1.bf16.msra.mxu0 %v141
  %163 = vmatprep.subr.bf16.mxu0 0
  %164 = vmatpush1.bf16.msra.mxu0 %v142
  %165 = vmatprep.subr.bf16.mxu0 0
  %166 = vmatpush1.bf16.msra.mxu0 %v143
  %167 = vmatprep.subr.bf16.mxu0 0
  %168 = vmatpush1.bf16.msra.mxu0 %v144
  %169 = vmatprep.subr.bf16.mxu0 0
  %170 = vmatpush1.bf16.msra.mxu0 0
  %171 = vmatprep.subr.bf16.mxu0 0
  %172 = vmatpush1.bf16.msra.mxu0 0
  %173 = vmatprep.subr.bf16.mxu0 0
  %174 = vmatpush1.bf16.msra.mxu0 0
  %175 = vmatprep.subr.bf16.mxu0 0
  %176 = vmatpush1.bf16.msra.mxu0 0
  %177 = vmatprep.subr.bf16.mxu0 0
  %178 = vmatpush1.bf16.msra.mxu0 0
  %179 = vmatprep.subr.bf16.mxu0 0
  %180 = vmatpush1.bf16.msra.mxu0 0
  %181 = vmatprep.subr.bf16.mxu0 0
  %182 = vmatpush1.bf16.msra.mxu0 0
  %183 = vmatprep.subr.bf16.mxu0 0
  %184 = vmatpush1.bf16.msra.mxu0 0
  %185 = vmatprep.mubr.bf16.mxu0 0
  %186 = vmatmul.mubr.bf16.gmra.mrb[0].mxu0 %v61
  %v187 = vpop.f32.mrb[0].mxu0
  %v188 = vadd.f32 %v102, %v187
  %v189 = vpop.f32.mrb[0].mxu0
  %v190 = vpop.f32.mrb[0].mxu0
  %v191 = vadd.f32 %v103, %v190
  %v192 = vpop.f32.mrb[0].mxu0
  %193 = vdwg.mxu0
  %v194 = vadd.f32 %v188, %v104
  %v195 = vadd.f32 %v191, %v104
  %v196 = vld [vmem:[%s12] sm:$0x1]
  %v197 = vld [vmem:[%s12 + $0x1] sm:$0x1]
  %vm198 = vcmask 261120
  %v199 = vsel %vm198, %v194, 0.0
  %200 = vadd.xlane.f32.xlu0 %v199
  %v201 = vpop.xlane.xlu0 %200
  %v202 = vsel %vm198, %v195, 0.0
  %203 = vadd.xlane.f32.xlu0 %v202
  %v204 = vpop.xlane.xlu0 %203
  %v205 = vrcp.pop 32.0
  %v206 = vmul.f32 %v201, %v205
  %v207 = vmul.f32 %v204, %v205
  %v208 = vsub.f32 %v194, %v206
  %v209 = vsub.f32 %v195, %v207
  %v210 = vmul.f32 %v208, %v208
  %v211 = vmul.f32 %v209, %v209
  %v212 = vsel %vm198, %v210, 0.0
  %213 = vadd.xlane.f32.xlu0 %v212
  %v214 = vpop.xlane.xlu0 %213
  %v215 = vsel %vm198, %v211, 0.0
  %216 = vadd.xlane.f32.xlu0 %v215
  %v217 = vpop.xlane.xlu0 %216
  %v218 = vmul.f32 %v214, %v205
  %v219 = vmul.f32 %v217, %v205
  %v220 = vadd.f32 %v218, 1e-12
  %v221 = vadd.f32 %v219, 1e-12
  %v222 = vrsqrt.pop %v220
  %v223 = vrsqrt.pop %v221
  %v224 = vmul.f32 %v208, %v222
  %v225 = vmul.f32 %v209, %v223
  %v226 = vlaneseq
  %v227 = vshrl.u32 %v226, 7
  %v228 = vsub.s32 0, %v227
  %v229 = vrot.slane %v196, %v228
  %v230 = vmul.f32 %v224, %v229
  %v231 = vmul.f32 %v225, %v229
  %v232 = vlaneseq
  %v233 = vshrl.u32 %v232, 7
  %v234 = vsub.s32 0, %v233
  %v235 = vrot.slane %v197, %v234
  %v236 = vadd.f32 %v230, %v235
  %v237 = vadd.f32 %v231, %v235
  %v238 = vld [vmem:[%s2] sm:$0x1]
  %v239 = vcvt.s32.f32 %v238
  %v240 = vsub.f32 1.0, %v239
  %v241 = vmul.f32 %v240, -10000.0
  %v243 = vlaneseq
  %v244 = vshrl.u32 %v243, 7
  %v245 = vsub.s32 0, %v244
  %v246 = vrot.slane %v241, %v245
  %247 = vrot.lane.b32.xlu0 %v246, 16
  %v248 = vpop.permute.xlu0 %247
  %vm250 = vcmask 130048
  %v251 = vsel %vm250, %v241, %v248
  %v252 = vld [vmem:[%s3] sm:$0xff]
  %v253 = vld [vmem:[%s3 + $0x8] sm:$0xff]
  %v254 = vld [vmem:[%s3 + $0x10] sm:$0xff]
  %v255 = vld [vmem:[%s3 + $0x18] sm:$0xff]
  %v256 = vlaneseq
  %v257 = vshrl.u32 %v256, 7
  %v258 = vsub.s32 0, %v257
  %v259 = vrot.slane %v251, %v258
  %v260 = vadd.f32 %v252, %v259
  %v261 = vadd.f32 %v253, %v259
  %v262 = vadd.f32 %v254, %v259
  %v263 = vadd.f32 %v255, %v259
  %v264 = vpack.c.bf16 %v237, %v236
  %v265 = vld [vmem:[%s7] sm:$0xf]
  %v266 = vld [vmem:[%s7 + $0x4] sm:$0xf]
  %v267 = vld [vmem:[%s7 + $0x8] sm:$0xf]
  %v268 = vld [vmem:[%s7 + $0xc] sm:$0xf]
  %v269 = vld [vmem:[%s12 + $0x2] sm:$0x1]
  %v270 = vlaneseq
  %v271 = vshrl.u32 %v270, 7
  %v272 = vsub.s32 0, %v271
  %v273 = vrot.slane %v269, %v272
  %v278 = vunpack.c.l.b16 %v265
  %v279 = vunpack.c.l.b16 %v266
  %v280 = vunpack.c.l.b16 %v267
  %v281 = vunpack.c.l.b16 %v268
  %v282 = vpack.c.b16 %v279, %v278
  %v283 = vpack.c.b16 %v281, %v280
  %v287 = vsel %vm198, %v264, 0
  %289 = vmatprep.subr.bf16.mxu0 0
  %290 = vmatpush1.bf16.msra.mxu0 %v282
  %291 = vmatprep.subr.bf16.mxu0 0
  %292 = vmatpush1.bf16.msra.mxu0 %v283
  %293 = vmatprep.subr.bf16.mxu0 0
  %294 = vmatpush1.bf16.msra.mxu0 0
  %295 = vmatprep.subr.bf16.mxu0 0
  %296 = vmatpush1.bf16.msra.mxu0 0
  %297 = vmatprep.subr.bf16.mxu0 0
  %298 = vmatpush1.bf16.msra.mxu0 0
  %299 = vmatprep.subr.bf16.mxu0 0
  %300 = vmatpush1.bf16.msra.mxu0 0
  %301 = vmatprep.subr.bf16.mxu0 0
  %302 = vmatpush1.bf16.msra.mxu0 0
  %303 = vmatprep.subr.bf16.mxu0 0
  %304 = vmatpush1.bf16.msra.mxu0 0
  %305 = vmatprep.subr.bf16.mxu0 0
  %306 = vmatpush1.bf16.msra.mxu0 0
  %307 = vmatprep.subr.bf16.mxu0 0
  %308 = vmatpush1.bf16.msra.mxu0 0
  %309 = vmatprep.subr.bf16.mxu0 0
  %310 = vmatpush1.bf16.msra.mxu0 0
  %311 = vmatprep.subr.bf16.mxu0 0
  %312 = vmatpush1.bf16.msra.mxu0 0
  %313 = vmatprep.subr.bf16.mxu0 0
  %314 = vmatpush1.bf16.msra.mxu0 0
  %315 = vmatprep.subr.bf16.mxu0 0
  %316 = vmatpush1.bf16.msra.mxu0 0
  %317 = vmatprep.subr.bf16.mxu0 0
  %318 = vmatpush1.bf16.msra.mxu0 0
  %319 = vmatprep.subr.bf16.mxu0 0
  %320 = vmatpush1.bf16.msra.mxu0 0
  %321 = vmatprep.mubr.bf16.mxu0 0
  %322 = vmatmul.mubr.bf16.gmra.mrb[0].mxu0 %v287
  %v323 = vpop.f32.mrb[0].mxu0
  %v324 = vadd.f32 %v273, %v323
  %v325 = vpop.f32.mrb[0].mxu0
  %v326 = vpop.f32.mrb[0].mxu0
  %v327 = vadd.f32 %v273, %v326
  %v328 = vpop.f32.mrb[0].mxu0
  %329 = vdwg.mxu0
  %332 = vrot.lane.b32.xlu0 %v324, 112
  %v333 = vpop.permute.xlu0 %332
  %334 = vrot.lane.b32.xlu0 %v327, 112
  %v335 = vpop.permute.xlu0 %334
  %v338 = vpack.c.bf16 %v327, %v324
  %v339 = vpack.c.bf16 %v335, %v333
  %340 = vrot.lane.b32.xlu0 %v324, 96
  %v341 = vpop.permute.xlu0 %340
  %342 = vrot.lane.b32.xlu0 %v327, 96
  %v343 = vpop.permute.xlu0 %342
  %344 = vrot.lane.b32.xlu0 %v333, 96
  %v345 = vpop.permute.xlu0 %344
  %346 = vrot.lane.b32.xlu0 %v335, 96
  %v347 = vpop.permute.xlu0 %346
  %352 = vxpose.xlu0.b32.start [1/16] %v341, 128
  %353 = vxpose.xlu0.b32.cont [2/16] %v343, 128
  %354 = vxpose.xlu0.b32.cont [3/16] %v345, 128
  %355 = vxpose.xlu0.b32.cont [4/16] %v347, 128
  %356 = vxpose.xlu0.b32.cont [5/16] 0.0, 128
  %357 = vxpose.xlu0.b32.cont [6/16] 0.0, 128
  %358 = vxpose.xlu0.b32.cont [7/16] 0.0, 128
  %359 = vxpose.xlu0.b32.cont [8/16] 0.0, 128
  %360 = vxpose.xlu0.b32.cont [9/16] 0.0, 128
  %361 = vxpose.xlu0.b32.cont [10/16] 0.0, 128
  %362 = vxpose.xlu0.b32.cont [11/16] 0.0, 128
  %363 = vxpose.xlu0.b32.cont [12/16] 0.0, 128
  %364 = vxpose.xlu0.b32.cont [13/16] 0.0, 128
  %365 = vxpose.xlu0.b32.cont [14/16] 0.0, 128
  %366 = vxpose.xlu0.b32.cont [15/16] 0.0, 128
  %367 = vxpose.xlu0.b32.end [16/16] 0.0, 128
  %v368 = vpop.trf.xlu0
  %v369 = vpop.trf.xlu0
  %v370 = vpop.trf.xlu0
  %v371 = vpop.trf.xlu0
  %v372 = vpop.trf.xlu0
  %v373 = vpop.trf.xlu0
  %v374 = vpop.trf.xlu0
  %v375 = vpop.trf.xlu0
  %v376 = vpop.trf.xlu0
  %v377 = vpop.trf.xlu0
  %v378 = vpop.trf.xlu0
  %v379 = vpop.trf.xlu0
  %v380 = vpop.trf.xlu0
  %v381 = vpop.trf.xlu0
  %v382 = vpop.trf.xlu0
  %v383 = vpop.trf.xlu0
  %v384 = vpack.c.bf16 %v369, %v368
  %v386 = vsel %vm250, %v338, 0
  %v389 = vsel %vm250, %v339, 0
  %391 = vmatprep.subr.bf16.mxu0 0
  %392 = vmatpush1.bf16.msra.mxu0 %v384
  %393 = vmatprep.subr.bf16.mxu0 0
  %394 = vmatpush1.bf16.msra.mxu0 0
  %395 = vmatprep.subr.bf16.mxu0 0
  %396 = vmatpush1.bf16.msra.mxu0 0
  %397 = vmatprep.subr.bf16.mxu0 0
  %398 = vmatpush1.bf16.msra.mxu0 0
  %399 = vmatprep.subr.bf16.mxu0 0
  %400 = vmatpush1.bf16.msra.mxu0 0
  %401 = vmatprep.subr.bf16.mxu0 0
  %402 = vmatpush1.bf16.msra.mxu0 0
  %403 = vmatprep.subr.bf16.mxu0 0
  %404 = vmatpush1.bf16.msra.mxu0 0
  %405 = vmatprep.subr.bf16.mxu0 0
  %406 = vmatpush1.bf16.msra.mxu0 0
  %407 = vmatprep.subr.bf16.mxu0 0
  %408 = vmatpush1.bf16.msra.mxu0 0
  %409 = vmatprep.subr.bf16.mxu0 0
  %410 = vmatpush1.bf16.msra.mxu0 0
  %411 = vmatprep.subr.bf16.mxu0 0
  %412 = vmatpush1.bf16.msra.mxu0 0
  %413 = vmatprep.subr.bf16.mxu0 0
  %414 = vmatpush1.bf16.msra.mxu0 0
  %415 = vmatprep.subr.bf16.mxu0 0
  %416 = vmatpush1.bf16.msra.mxu0 0
  %417 = vmatprep.subr.bf16.mxu0 0
  %418 = vmatpush1.bf16.msra.mxu0 0
  %419 = vmatprep.subr.bf16.mxu0 0
  %420 = vmatpush1.bf16.msra.mxu0 0
  %421 = vmatprep.subr.bf16.mxu0 0
  %422 = vmatpush1.bf16.msra.mxu0 0
  %423 = vmatprep.mubr.bf16.mxu0 0
  %424 = vmatmul.mubr.bf16.gmra.mrb[0].mxu0 %v386
  %v425 = vpop.f32.mrb[0].mxu0
  %v426 = vadd.f32 0.0, %v425
  %v427 = vpop.f32.mrb[0].mxu0
  %v428 = vpop.f32.mrb[0].mxu0
  %v429 = vadd.f32 0.0, %v428
  %v430 = vpop.f32.mrb[0].mxu0
  %431 = vmatprep.mubr.bf16.mxu0 0
  %432 = vmatmul.mubr.bf16.gmra.mrb[0].mxu0 %v389
  %v433 = vpop.f32.mrb[0].mxu0
  %v434 = vadd.f32 0.0, %v433
  %v435 = vpop.f32.mrb[0].mxu0
  %v436 = vpop.f32.mrb[0].mxu0
  %v437 = vadd.f32 0.0, %v436
  %v438 = vpop.f32.mrb[0].mxu0
  %439 = vdwg.mxu0
  %v440 = vmul.f32 %v426, 0.25
  %v441 = vmul.f32 %v429, 0.25
  %v442 = vmul.f32 %v434, 0.25
  %v443 = vmul.f32 %v437, 0.25
  %v444 = vadd.f32 %v440, %v260
  %v445 = vadd.f32 %v441, %v261
  %v446 = vadd.f32 %v442, %v262
  %v447 = vadd.f32 %v443, %v263
  %v448 = vsel %vm198, %v444, -inf
  %449 = vmax.xlane.f32.xlu0 %v448
  %v450 = vpop.xlane.xlu0 %449
  %v451 = vsel %vm198, %v445, -inf
  %452 = vmax.xlane.f32.xlu0 %v451
  %v453 = vpop.xlane.xlu0 %452
  %v454 = vsel %vm198, %v446, -inf
  %455 = vmax.xlane.f32.xlu0 %v454
  %v456 = vpop.xlane.xlu0 %455
  %v457 = vsel %vm198, %v447, -inf
  %458 = vmax.xlane.f32.xlu0 %v457
  %v459 = vpop.xlane.xlu0 %458
  %v460 = vsub.f32 %v444, %v450
  %v461 = vsub.f32 %v445, %v453
  %v462 = vsub.f32 %v446, %v456
  %v463 = vsub.f32 %v447, %v459
  %v464 = vmul.f32 %v460, 1.442695
  %v465 = vpow.pop %v464
  %v466 = vmul.f32 %v461, 1.442695
  %v467 = vpow.pop %v466
  %v468 = vmul.f32 %v462, 1.442695
  %v469 = vpow.pop %v468
  %v470 = vmul.f32 %v463, 1.442695
  %v471 = vpow.pop %v470
  %v472 = vsel %vm198, %v465, 0.0
  %473 = vadd.xlane.f32.xlu0 %v472
  %v474 = vpop.xlane.xlu0 %473
  %v475 = vsel %vm198, %v467, 0.0
  %476 = vadd.xlane.f32.xlu0 %v475
  %v477 = vpop.xlane.xlu0 %476
  %v478 = vsel %vm198, %v469, 0.0
  %479 = vadd.xlane.f32.xlu0 %v478
  %v480 = vpop.xlane.xlu0 %479
  %v481 = vsel %vm198, %v471, 0.0
  %482 = vadd.xlane.f32.xlu0 %v481
  %v483 = vpop.xlane.xlu0 %482
  %v484 = vrcp.pop %v474
  %v485 = vrcp.pop %v477
  %v486 = vrcp.pop %v480
  %v487 = vrcp.pop %v483
  %v488 = vmul.f32 %v465, %v484
  %v489 = vmul.f32 %v467, %v485
  %v490 = vmul.f32 %v469, %v486
  %v491 = vmul.f32 %v471, %v487
  %v492 = vpack.c.bf16 %v489, %v488
  %v493 = vpack.c.bf16 %v491, %v490
  %496 = vrot.lane.b32.xlu0 %v338, 64
  %v497 = vpop.permute.xlu0 %496
  %498 = vrot.lane.b32.xlu0 %v339, 64
  %v499 = vpop.permute.xlu0 %498
  %v503 = vsel %vm198, %v492, 0
  %v506 = vsel %vm198, %v493, 0
  %508 = vmatprep.subr.bf16.mxu0 0
  %509 = vmatpush1.bf16.msra.mxu0 %v497
  %510 = vmatprep.subr.bf16.mxu0 0
  %511 = vmatpush1.bf16.msra.mxu0 %v499
  %512 = vmatprep.subr.bf16.mxu0 0
  %513 = vmatpush1.bf16.msra.mxu0 0
  %514 = vmatprep.subr.bf16.mxu0 0
  %515 = vmatpush1.bf16.msra.mxu0 0
  %516 = vmatprep.subr.bf16.mxu0 0
  %517 = vmatpush1.bf16.msra.mxu0 0
  %518 = vmatprep.subr.bf16.mxu0 0
  %519 = vmatpush1.bf16.msra.mxu0 0
  %520 = vmatprep.subr.bf16.mxu0 0
  %521 = vmatpush1.bf16.msra.mxu0 0
  %522 = vmatprep.subr.bf16.mxu0 0
  %523 = vmatpush1.bf16.msra.mxu0 0
  %524 = vmatprep.subr.bf16.mxu0 0
  %525 = vmatpush1.bf16.msra.mxu0 0
  %526 = vmatprep.subr.bf16.mxu0 0
  %527 = vmatpush1.bf16.msra.mxu0 0
  %528 = vmatprep.subr.bf16.mxu0 0
  %529 = vmatpush1.bf16.msra.mxu0 0
  %530 = vmatprep.subr.bf16.mxu0 0
  %531 = vmatpush1.bf16.msra.mxu0 0
  %532 = vmatprep.subr.bf16.mxu0 0
  %533 = vmatpush1.bf16.msra.mxu0 0
  %534 = vmatprep.subr.bf16.mxu0 0
  %535 = vmatpush1.bf16.msra.mxu0 0
  %536 = vmatprep.subr.bf16.mxu0 0
  %537 = vmatpush1.bf16.msra.mxu0 0
  %538 = vmatprep.subr.bf16.mxu0 0
  %539 = vmatpush1.bf16.msra.mxu0 0
  %540 = vmatprep.mubr.bf16.mxu0 0
  %541 = vmatmul.mubr.bf16.gmra.mrb[0].mxu0 %v503
  %v542 = vpop.f32.mrb[0].mxu0
  %v543 = vadd.f32 0.0, %v542
  %v544 = vpop.f32.mrb[0].mxu0
  %v545 = vpop.f32.mrb[0].mxu0
  %v546 = vadd.f32 0.0, %v545
  %v547 = vpop.f32.mrb[0].mxu0
  %548 = vmatprep.mubr.bf16.mxu0 0
  %549 = vmatmul.mubr.bf16.gmra.mrb[0].mxu0 %v506
  %v550 = vpop.f32.mrb[0].mxu0
  %v551 = vadd.f32 0.0, %v550
  %v552 = vpop.f32.mrb[0].mxu0
  %v553 = vpop.f32.mrb[0].mxu0
  %v554 = vadd.f32 0.0, %v553
  %v555 = vpop.f32.mrb[0].mxu0
  %556 = vdwg.mxu0
  %559 = vrot.lane.b32.xlu0 %v551, 16
  %v560 = vpop.permute.xlu0 %559
  %561 = vrot.lane.b32.xlu0 %v554, 16
  %v562 = vpop.permute.xlu0 %561
  %v565 = vsel %vm250, %v543, %v560
  %v566 = vsel %vm250, %v546, %v562
  %v567 = vpack.c.bf16 %v566, %v565
  %v568 = vld [vmem:[%s8] sm:$0xf]
  %v569 = vld [vmem:[%s8 + $0x4] sm:$0xf]
  %v570 = vld [vmem:[%s8 + $0x8] sm:$0xf]
  %v571 = vld [vmem:[%s8 + $0xc] sm:$0xf]
  %v572 = vld [vmem:[%s12 + $0x3] sm:$0x1]
  %v573 = vlaneseq
  %v574 = vshrl.u32 %v573, 7
  %v575 = vsub.s32 0, %v574
  %v576 = vrot.slane %v572, %v575
  %v581 = vunpack.c.l.b16 %v568
  %v582 = vunpack.c.l.b16 %v569
  %v583 = vunpack.c.l.b16 %v570
  %v584 = vunpack.c.l.b16 %v571
  %v585 = vpack.c.b16 %v582, %v581
  %v586 = vpack.c.b16 %v584, %v583
  %v590 = vsel %vm198, %v567, 0
  %592 = vmatprep.subr.bf16.mxu0 0
  %593 = vmatpush1.bf16.msra.mxu0 %v585
  %594 = vmatprep.subr.bf16.mxu0 0
  %595 = vmatpush1.bf16.msra.mxu0 %v586
  %596 = vmatprep.subr.bf16.mxu0 0
  %597 = vmatpush1.bf16.msra.mxu0 0
  %598 = vmatprep.subr.bf16.mxu0 0
  %599 = vmatpush1.bf16.msra.mxu0 0
  %600 = vmatprep.subr.bf16.mxu0 0
  %601 = vmatpush1.bf16.msra.mxu0 0
  %602 = vmatprep.subr.bf16.mxu0 0
  %603 = vmatpush1.bf16.msra.mxu0 0
  %604 = vmatprep.subr.bf16.mxu0 0
  %605 = vmatpush1.bf16.msra.mxu0 0
  %606 = vmatprep.subr.bf16.mxu0 0
  %607 = vmatpush1.bf16.msra.mxu0 0
  %608 = vmatprep.subr.bf16.mxu0 0
  %609 = vmatpush1.bf16.msra.mxu0 0
  %610 = vmatprep.subr.bf16.mxu0 0
  %611 = vmatpush1.bf16.msra.mxu0 0
  %612 = vmatprep.subr.bf16.mxu0 0
  %613 = vmatpush1.bf16.msra.mxu0 0
  %614 = vmatprep.subr.bf16.mxu0 0
  %615 = vmatpush1.bf16.msra.mxu0 0
  %616 = vmatprep.subr.bf16.mxu0 0
  %617 = vmatpush1.bf16.msra.mxu0 0
  %618 = vmatprep.subr.bf16.mxu0 0
  %619 = vmatpush1.bf16.msra.mxu0 0
  %620 = vmatprep.subr.bf16.mxu0 0
  %621 = vmatpush1.bf16.msra.mxu0 0
  %622 = vmatprep.subr.bf16.mxu0 0
  %623 = vmatpush1.bf16.msra.mxu0 0
  %624 = vmatprep.mubr.bf16.mxu0 0
  %625 = vmatmul.mubr.bf16.gmra.mrb[0].mxu0 %v590
  %v626 = vpop.f32.mrb[0].mxu0
  %v627 = vadd.f32 %v576, %v626
  %v628 = vpop.f32.mrb[0].mxu0
  %v629 = vpop.f32.mrb[0].mxu0
  %v630 = vadd.f32 %v576, %v629
  %v631 = vpop.f32.mrb[0].mxu0
  %632 = vdwg.mxu0
  %v633 = vadd.f32 %v627, %v236
  %v634 = vadd.f32 %v630, %v237
  %v635 = vld [vmem:[%s12 + $0x4] sm:$0x1]
  %v636 = vld [vmem:[%s12 + $0x5] sm:$0x1]
  %v637 = vsel %vm198, %v633, 0.0
  %638 = vadd.xlane.f32.xlu0 %v637
  %v639 = vpop.xlane.xlu0 %638
  %v640 = vsel %vm198, %v634, 0.0
  %641 = vadd.xlane.f32.xlu0 %v640
  %v642 = vpop.xlane.xlu0 %641
  %v643 = vmul.f32 %v639, %v205
  %v644 = vmul.f32 %v642, %v205
  %v645 = vsub.f32 %v633, %v643
  %v646 = vsub.f32 %v634, %v644
  %v647 = vmul.f32 %v645, %v645
  %v648 = vmul.f32 %v646, %v646
  %v649 = vsel %vm198, %v647, 0.0
  %650 = vadd.xlane.f32.xlu0 %v649
  %v651 = vpop.xlane.xlu0 %650
  %v652 = vsel %vm198, %v648, 0.0
  %653 = vadd.xlane.f32.xlu0 %v652
  %v654 = vpop.xlane.xlu0 %653
  %v655 = vmul.f32 %v651, %v205
  %v656 = vmul.f32 %v654, %v205
  %v657 = vadd.f32 %v655, 1e-12
  %v658 = vadd.f32 %v656, 1e-12
  %v659 = vrsqrt.pop %v657
  %v660 = vrsqrt.pop %v658
  %v661 = vmul.f32 %v645, %v659
  %v662 = vmul.f32 %v646, %v660
  %v663 = vlaneseq
  %v664 = vshrl.u32 %v663, 7
  %v665 = vsub.s32 0, %v664
  %v666 = vrot.slane %v635, %v665
  %v667 = vmul.f32 %v661, %v666
  %v668 = vmul.f32 %v662, %v666
  %v669 = vlaneseq
  %v670 = vshrl.u32 %v669, 7
  %v671 = vsub.s32 0, %v670
  %v672 = vrot.slane %v636, %v671
  %v673 = vadd.f32 %v667, %v672
  %v674 = vadd.f32 %v668, %v672
  %v675 = vpack.c.bf16 %v674, %v673
  %v676 = vld [vmem:[%s9] sm:$0xf]
  %v677 = vld [vmem:[%s9 + $0x4] sm:$0xf]
  %v678 = vld [vmem:[%s9 + $0x8] sm:$0xf]
  %v679 = vld [vmem:[%s9 + $0xc] sm:$0xf]
  %v680 = vld [vmem:[%s12 + $0x6] sm:$0x1]
  %v681 = vlaneseq
  %v682 = vshrl.u32 %v681, 7
  %v683 = vsub.s32 0, %v682
  %v684 = vrot.slane %v680, %v683
  %v689 = vunpack.c.l.b16 %v676
  %v690 = vunpack.c.l.b16 %v677
  %v691 = vunpack.c.l.b16 %v678
  %v692 = vunpack.c.l.b16 %v679
  %v693 = vpack.c.b16 %v690, %v689
  %v694 = vpack.c.b16 %v692, %v691
  %v698 = vsel %vm198, %v675, 0
  %700 = vmatprep.subr.bf16.mxu0 0
  %701 = vmatpush1.bf16.msra.mxu0 %v693
  %702 = vmatprep.subr.bf16.mxu0 0
  %703 = vmatpush1.bf16.msra.mxu0 %v694
  %704 = vmatprep.subr.bf16.mxu0 0
  %705 = vmatpush1.bf16.msra.mxu0 0
  %706 = vmatprep.subr.bf16.mxu0 0
  %707 = vmatpush1.bf16.msra.mxu0 0
  %708 = vmatprep.subr.bf16.mxu0 0
  %709 = vmatpush1.bf16.msra.mxu0 0
  %710 = vmatprep.subr.bf16.mxu0 0
  %711 = vmatpush1.bf16.msra.mxu0 0
  %712 = vmatprep.subr.bf16.mxu0 0
  %713 = vmatpush1.bf16.msra.mxu0 0
  %714 = vmatprep.subr.bf16.mxu0 0
  %715 = vmatpush1.bf16.msra.mxu0 0
  %716 = vmatprep.subr.bf16.mxu0 0
  %717 = vmatpush1.bf16.msra.mxu0 0
  %718 = vmatprep.subr.bf16.mxu0 0
  %719 = vmatpush1.bf16.msra.mxu0 0
  %720 = vmatprep.subr.bf16.mxu0 0
  %721 = vmatpush1.bf16.msra.mxu0 0
  %722 = vmatprep.subr.bf16.mxu0 0
  %723 = vmatpush1.bf16.msra.mxu0 0
  %724 = vmatprep.subr.bf16.mxu0 0
  %725 = vmatpush1.bf16.msra.mxu0 0
  %726 = vmatprep.subr.bf16.mxu0 0
  %727 = vmatpush1.bf16.msra.mxu0 0
  %728 = vmatprep.subr.bf16.mxu0 0
  %729 = vmatpush1.bf16.msra.mxu0 0
  %730 = vmatprep.subr.bf16.mxu0 0
  %731 = vmatpush1.bf16.msra.mxu0 0
  %732 = vmatprep.mubr.bf16.mxu0 0
  %733 = vmatmul.mubr.bf16.gmra.mrb[0].mxu0 %v698
  %v734 = vpop.f32.mrb[0].mxu0
  %v735 = vadd.f32 %v684, %v734
  %v736 = vpop.f32.mrb[0].mxu0
  %v737 = vpop.f32.mrb[0].mxu0
  %v738 = vadd.f32 %v684, %v737
  %v739 = vpop.f32.mrb[0].mxu0
  %740 = vdwg.mxu0
  %v741 = vmul.f32 %v735, 0.5
  %v742 = vmul.f32 %v738, 0.5
  %v743 = vmul.f32 %v735, 0.70710677
  %v744 = vmul.f32 %v738, 0.70710677
  %v745 = verf.f32.pop %v743
  %v746 = verf.f32.pop %v744
  %v747 = vadd.f32 %v745, 1.0
  %v748 = vadd.f32 %v746, 1.0
  %v749 = vmul.f32 %v741, %v747
  %v750 = vmul.f32 %v742, %v748
  %v751 = vpack.c.bf16 %v750, %v749
  %v752 = vld [vmem:[%s10] sm:$0xf]
  %v753 = vld [vmem:[%s10 + $0x4] sm:$0xf]
  %v754 = vld [vmem:[%s10 + $0x8] sm:$0xf]
  %v755 = vld [vmem:[%s10 + $0xc] sm:$0xf]
  %v756 = vld [vmem:[%s10 + $0x10] sm:$0xf]
  %v757 = vld [vmem:[%s10 + $0x14] sm:$0xf]
  %v758 = vld [vmem:[%s10 + $0x18] sm:$0xf]
  %v759 = vld [vmem:[%s10 + $0x1c] sm:$0xf]
  %v760 = vld [vmem:[%s12 + $0x7] sm:$0x1]
  %v761 = vlaneseq
  %v762 = vshrl.u32 %v761, 7
  %v763 = vsub.s32 0, %v762
  %v764 = vrot.slane %v760, %v763
  %v773 = vunpack.c.l.b16 %v752
  %v774 = vunpack.c.l.b16 %v753
  %v775 = vunpack.c.l.b16 %v754
  %v776 = vunpack.c.l.b16 %v755
  %v777 = vunpack.c.l.b16 %v756
  %v778 = vunpack.c.l.b16 %v757
  %v779 = vunpack.c.l.b16 %v758
  %v780 = vunpack.c.l.b16 %v759
  %v781 = vpack.c.b16 %v774, %v773
  %v782 = vpack.c.b16 %v776, %v775
  %v783 = vpack.c.b16 %v778, %v777
  %v784 = vpack.c.b16 %v780, %v779
  %vm789 = vcmask 523264
  %v791 = vsel %vm789, %v751, 0
  %793 = vmatprep.subr.bf16.mxu0 0
  %794 = vmatpush1.bf16.msra.mxu0 %v781
  %795 = vmatprep.subr.bf16.mxu0 0
  %796 = vmatpush1.bf16.msra.mxu0 %v782
  %797 = vmatprep.subr.bf16.mxu0 0
  %798 = vmatpush1.bf16.msra.mxu0 %v783
  %799 = vmatprep.subr.bf16.mxu0 0
  %800 = vmatpush1.bf16.msra.mxu0 %v784
  %801 = vmatprep.subr.bf16.mxu0 0
  %802 = vmatpush1.bf16.msra.mxu0 0
  %803 = vmatprep.subr.bf16.mxu0 0
  %804 = vmatpush1.bf16.msra.mxu0 0
  %805 = vmatprep.subr.bf16.mxu0 0
  %806 = vmatpush1.bf16.msra.mxu0 0
  %807 = vmatprep.subr.bf16.mxu0 0
  %808 = vmatpush1.bf16.msra.mxu0 0
  %809 = vmatprep.subr.bf16.mxu0 0
  %810 = vmatpush1.bf16.msra.mxu0 0
  %811 = vmatprep.subr.bf16.mxu0 0
  %812 = vmatpush1.bf16.msra.mxu0 0
  %813 = vmatprep.subr.bf16.mxu0 0
  %814 = vmatpush1.bf16.msra.mxu0 0
  %815 = vmatprep.subr.bf16.mxu0 0
  %816 = vmatpush1.bf16.msra.mxu0 0
  %817 = vmatprep.subr.bf16.mxu0 0
  %818 = vmatpush1.bf16.msra.mxu0 0
  %819 = vmatprep.subr.bf16.mxu0 0
  %820 = vmatpush1.bf16.msra.mxu0 0
  %821 = vmatprep.subr.bf16.mxu0 0
  %822 = vmatpush1.bf16.msra.mxu0 0
  %823 = vmatprep.subr.bf16.mxu0 0
  %824 = vmatpush1.bf16.msra.mxu0 0
  %825 = vmatprep.mubr.bf16.mxu0 0
  %826 = vmatmul.mubr.bf16.gmra.mrb[0].mxu0 %v791
  %v827 = vpop.f32.mrb[0].mxu0
  %v828 = vadd.f32 %v764, %v827
  %v829 = vpop.f32.mrb[0].mxu0
  %v830 = vpop.f32.mrb[0].mxu0
  %v831 = vadd.f32 %v764, %v830
  %v832 = vpop.f32.mrb[0].mxu0
  %833 = vdwg.mxu0
  %v834 = vadd.f32 %v828, %v673
  %v835 = vadd.f32 %v831, %v674
  %v836 = vld [vmem:[%s12 + $0x8] sm:$0x1]
  %v837 = vld [vmem:[%s12 + $0x9] sm:$0x1]
  %v838 = vsel %vm198, %v834, 0.0
  %839 = vadd.xlane.f32.xlu0 %v838
  %v840 = vpop.xlane.xlu0 %839
  %v841 = vsel %vm198, %v835, 0.0
  %842 = vadd.xlane.f32.xlu0 %v841
  %v843 = vpop.xlane.xlu0 %842
  %v844 = vmul.f32 %v840, %v205
  %v845 = vmul.f32 %v843, %v205
  %v846 = vsub.f32 %v834, %v844
  %v847 = vsub.f32 %v835, %v845
  %v848 = vmul.f32 %v846, %v846
  %v849 = vmul.f32 %v847, %v847
  %v850 = vsel %vm198, %v848, 0.0
  %851 = vadd.xlane.f32.xlu0 %v850
  %v852 = vpop.xlane.xlu0 %851
  %v853 = vsel %vm198, %v849, 0.0
  %854 = vadd.xlane.f32.xlu0 %v853
  %v855 = vpop.xlane.xlu0 %854
  %v856 = vmul.f32 %v852, %v205
  %v857 = vmul.f32 %v855, %v205
  %v858 = vadd.f32 %v856, 1e-12
  %v859 = vadd.f32 %v857, 1e-12
  %v860 = vrsqrt.pop %v858
  %v861 = vrsqrt.pop %v859
  %v862 = vmul.f32 %v846, %v860
  %v863 = vmul.f32 %v847, %v861
  %v864 = vlaneseq
  %v865 = vshrl.u32 %v864, 7
  %v866 = vsub.s32 0, %v865
  %v867 = vrot.slane %v836, %v866
  %v868 = vmul.f32 %v862, %v867
  %v869 = vmul.f32 %v863, %v867
  %v870 = vlaneseq
  %v871 = vshrl.u32 %v870, 7
  %v872 = vsub.s32 0, %v871
  %v873 = vrot.slane %v837, %v872
  %v874 = vadd.f32 %v868, %v873
  %v875 = vadd.f32 %v869, %v873
  %v876 = vpack.c.bf16 %v875, %v874
  %s877 = scalar_lea.vmem %s7, 16
  %v878 = vld [vmem:[%s877] sm:$0xf]
  %v879 = vld [vmem:[%s877 + $0x4] sm:$0xf]
  %v880 = vld [vmem:[%s877 + $0x8] sm:$0xf]
  %v881 = vld [vmem:[%s877 + $0xc] sm:$0xf]
  %v882 = vld [vmem:[%s12 + $0xa] sm:$0x1]
  %v883 = vlaneseq
  %v884 = vshrl.u32 %v883, 7
  %v885 = vsub.s32 0, %v884
  %v886 = vrot.slane %v882, %v885
  %v891 = vunpack.c.l.b16 %v878
  %v892 = vunpack.c.l.b16 %v879
  %v893 = vunpack.c.l.b16 %v880
  %v894 = vunpack.c.l.b16 %v881
  %v895 = vpack.c.b16 %v892, %v891
  %v896 = vpack.c.b16 %v894, %v893
  %v900 = vsel %vm198, %v876, 0
  %902 = vmatprep.subr.bf16.mxu0 0
  %903 = vmatpush1.bf16.msra.mxu0 %v895
  %904 = vmatprep.subr.bf16.mxu0 0
  %905 = vmatpush1.bf16.msra.mxu0 %v896
  %906 = vmatprep.subr.bf16.mxu0 0
  %907 = vmatpush1.bf16.msra.mxu0 0
  %908 = vmatprep.subr.bf16.mxu0 0
  %909 = vmatpush1.bf16.msra.mxu0 0
  %910 = vmatprep.subr.bf16.mxu0 0
  %911 = vmatpush1.bf16.msra.mxu0 0
  %912 = vmatprep.subr.bf16.mxu0 0
  %913 = vmatpush1.bf16.msra.mxu0 0
  %914 = vmatprep.subr.bf16.mxu0 0
  %915 = vmatpush1.bf16.msra.mxu0 0
  %916 = vmatprep.subr.bf16.mxu0 0
  %917 = vmatpush1.bf16.msra.mxu0 0
  %918 = vmatprep.subr.bf16.mxu0 0
  %919 = vmatpush1.bf16.msra.mxu0 0
  %920 = vmatprep.subr.bf16.mxu0 0
  %921 = vmatpush1.bf16.msra.mxu0 0
  %922 = vmatprep.subr.bf16.mxu0 0
  %923 = vmatpush1.bf16.msra.mxu0 0
  %924 = vmatprep.subr.bf16.mxu0 0
  %925 = vmatpush1.bf16.msra.mxu0 0
  %926 = vmatprep.subr.bf16.mxu0 0
  %927 = vmatpush1.bf16.msra.mxu0 0
  %928 = vmatprep.subr.bf16.mxu0 0
  %929 = vmatpush1.bf16.msra.mxu0 0
  %930 = vmatprep.subr.bf16.mxu0 0
  %931 = vmatpush1.bf16.msra.mxu0 0
  %932 = vmatprep.subr.bf16.mxu0 0
  %933 = vmatpush1.bf16.msra.mxu0 0
  %934 = vmatprep.mubr.bf16.mxu0 0
  %935 = vmatmul.mubr.bf16.gmra.mrb[0].mxu0 %v900
  %v936 = vpop.f32.mrb[0].mxu0
  %v937 = vadd.f32 %v886, %v936
  %v938 = vpop.f32.mrb[0].mxu0
  %v939 = vpop.f32.mrb[0].mxu0
  %v940 = vadd.f32 %v886, %v939
  %v941 = vpop.f32.mrb[0].mxu0
  %942 = vdwg.mxu0
  %945 = vrot.lane.b32.xlu0 %v937, 112
  %v946 = vpop.permute.xlu0 %945
  %947 = vrot.lane.b32.xlu0 %v940, 112
  %v948 = vpop.permute.xlu0 %947
  %v951 = vpack.c.bf16 %v940, %v937
  %v952 = vpack.c.bf16 %v948, %v946
  %953 = vrot.lane.b32.xlu0 %v937, 96
  %v954 = vpop.permute.xlu0 %953
  %955 = vrot.lane.b32.xlu0 %v940, 96
  %v956 = vpop.permute.xlu0 %955
  %957 = vrot.lane.b32.xlu0 %v946, 96
  %v958 = vpop.permute.xlu0 %957
  %959 = vrot.lane.b32.xlu0 %v948, 96
  %v960 = vpop.permute.xlu0 %959
  %965 = vxpose.xlu0.b32.start [1/16] %v954, 128
  %966 = vxpose.xlu0.b32.cont [2/16] %v956, 128
  %967 = vxpose.xlu0.b32.cont [3/16] %v958, 128
  %968 = vxpose.xlu0.b32.cont [4/16] %v960, 128
  %969 = vxpose.xlu0.b32.cont [5/16] 0.0, 128
  %970 = vxpose.xlu0.b32.cont [6/16] 0.0, 128
  %971 = vxpose.xlu0.b32.cont [7/16] 0.0, 128
  %972 = vxpose.xlu0.b32.cont [8/16] 0.0, 128
  %973 = vxpose.xlu0.b32.cont [9/16] 0.0, 128
  %974 = vxpose.xlu0.b32.cont [10/16] 0.0, 128
  %975 = vxpose.xlu0.b32.cont [11/16] 0.0, 128
  %976 = vxpose.xlu0.b32.cont [12/16] 0.0, 128
  %977 = vxpose.xlu0.b32.cont [13/16] 0.0, 128
  %978 = vxpose.xlu0.b32.cont [14/16] 0.0, 128
  %979 = vxpose.xlu0.b32.cont [15/16] 0.0, 128
  %980 = vxpose.xlu0.b32.end [16/16] 0.0, 128
  %v981 = vpop.trf.xlu0
  %v982 = vpop.trf.xlu0
  %v983 = vpop.trf.xlu0
  %v984 = vpop.trf.xlu0
  %v985 = vpop.trf.xlu0
  %v986 = vpop.trf.xlu0
  %v987 = vpop.trf.xlu0
  %v988 = vpop.trf.xlu0
  %v989 = vpop.trf.xlu0
  %v990 = vpop.trf.xlu0
  %v991 = vpop.trf.xlu0
  %v992 = vpop.trf.xlu0
  %v993 = vpop.trf.xlu0
  %v994 = vpop.trf.xlu0
  %v995 = vpop.trf.xlu0
  %v996 = vpop.trf.xlu0
  %v997 = vpack.c.bf16 %v982, %v981
  %v999 = vsel %vm250, %v951, 0
  %v1002 = vsel %vm250, %v952, 0
  %1004 = vmatprep.subr.bf16.mxu0 0
  %1005 = vmatpush1.bf16.msra.mxu0 %v997
  %1006 = vmatprep.subr.bf16.mxu0 0
  %1007 = vmatpush1.bf16.msra.mxu0 0
  %1008 = vmatprep.subr.bf16.mxu0 0
  %1009 = vmatpush1.bf16.msra.mxu0 0
  %1010 = vmatprep.subr.bf16.mxu0 0
  %1011 = vmatpush1.bf16.msra.mxu0 0
  %1012 = vmatprep.subr.bf16.mxu0 0
  %1013 = vmatpush1.bf16.msra.mxu0 0
  %1014 = vmatprep.subr.bf16.mxu0 0
  %1015 = vmatpush1.bf16.msra.mxu0 0
  %1016 = vmatprep.subr.bf16.mxu0 0
  %1017 = vmatpush1.bf16.msra.mxu0 0
  %1018 = vmatprep.subr.bf16.mxu0 0
  %1019 = vmatpush1.bf16.msra.mxu0 0
  %1020 = vmatprep.subr.bf16.mxu0 0
  %1021 = vmatpush1.bf16.msra.mxu0 0
  %1022 = vmatprep.subr.bf16.mxu0 0
  %1023 = vmatpush1.bf16.msra.mxu0 0
  %1024 = vmatprep.subr.bf16.mxu0 0
  %1025 = vmatpush1.bf16.msra.mxu0 0
  %1026 = vmatprep.subr.bf16.mxu0 0
  %1027 = vmatpush1.bf16.msra.mxu0 0
  %1028 = vmatprep.subr.bf16.mxu0 0
  %1029 = vmatpush1.bf16.msra.mxu0 0
  %1030 = vmatprep.subr.bf16.mxu0 0
  %1031 = vmatpush1.bf16.msra.mxu0 0
  %1032 = vmatprep.subr.bf16.mxu0 0
  %1033 = vmatpush1.bf16.msra.mxu0 0
  %1034 = vmatprep.subr.bf16.mxu0 0
  %1035 = vmatpush1.bf16.msra.mxu0 0
  %1036 = vmatprep.mubr.bf16.mxu0 0
  %1037 = vmatmul.mubr.bf16.gmra.mrb[0].mxu0 %v999
  %v1038 = vpop.f32.mrb[0].mxu0
  %v1039 = vadd.f32 0.0, %v1038
  %v1040 = vpop.f32.mrb[0].mxu0
  %v1041 = vpop.f32.mrb[0].mxu0
  %v1042 = vadd.f32 0.0, %v1041
  %v1043 = vpop.f32.mrb[0].mxu0
  %1044 = vmatprep.mubr.bf16.mxu0 0
  %1045 = vmatmul.mubr.bf16.gmra.mrb[0].mxu0 %v1002
  %v1046 = vpop.f32.mrb[0].mxu0
  %v1047 = vadd.f32 0.0, %v1046
  %v1048 = vpop.f32.mrb[0].mxu0
  %v1049 = vpop.f32.mrb[0].mxu0
  %v1050 = vadd.f32 0.0, %v1049
  %v1051 = vpop.f32.mrb[0].mxu0
  %1052 = vdwg.mxu0
  %v1053 = vmul.f32 %v1039, 0.25
  %v1054 = vmul.f32 %v1042, 0.25
  %v1055 = vmul.f32 %v1047, 0.25
  %v1056 = vmul.f32 %v1050, 0.25
  %v1057 = vadd.f32 %v1053, %v260
  %v1058 = vadd.f32 %v1054, %v261
  %v1059 = vadd.f32 %v1055, %v262
  %v1060 = vadd.f32 %v1056, %v263
  %v1061 = vsel %vm198, %v1057, -inf
  %1062 = vmax.xlane.f32.xlu0 %v1061
  %v1063 = vpop.xlane.xlu0 %1062
  %v1064 = vsel %vm198, %v1058, -inf
  %1065 = vmax.xlane.f32.xlu0 %v1064
  %v1066 = vpop.xlane.xlu0 %1065
  %v1067 = vsel %vm198, %v1059, -inf
  %1068 = vmax.xlane.f32.xlu0 %v1067
  %v1069 = vpop.xlane.xlu0 %1068
  %v1070 = vsel %vm198, %v1060, -inf
  %1071 = vmax.xlane.f32.xlu0 %v1070
  %v1072 = vpop.xlane.xlu0 %1071
  %v1073 = vsub.f32 %v1057, %v1063
  %v1074 = vsub.f32 %v1058, %v1066
  %v1075 = vsub.f32 %v1059, %v1069
  %v1076 = vsub.f32 %v1060, %v1072
  %v1077 = vmul.f32 %v1073, 1.442695
  %v1078 = vpow.pop %v1077
  %v1079 = vmul.f32 %v1074, 1.442695
  %v1080 = vpow.pop %v1079
  %v1081 = vmul.f32 %v1075, 1.442695
  %v1082 = vpow.pop %v1081
  %v1083 = vmul.f32 %v1076, 1.442695
  %v1084 = vpow.pop %v1083
  %v1085 = vsel %vm198, %v1078, 0.0
  %1086 = vadd.xlane.f32.xlu0 %v1085
  %v1087 = vpop.xlane.xlu0 %1086
  %v1088 = vsel %vm198, %v1080, 0.0
  %1089 = vadd.xlane.f32.xlu0 %v1088
  %v1090 = vpop.xlane.xlu0 %1089
  %v1091 = vsel %vm198, %v1082, 0.0
  %1092 = vadd.xlane.f32.xlu0 %v1091
  %v1093 = vpop.xlane.xlu0 %1092
  %v1094 = vsel %vm198, %v1084, 0.0
  %1095 = vadd.xlane.f32.xlu0 %v1094
  %v1096 = vpop.xlane.xlu0 %1095
  %v1097 = vrcp.pop %v1087
  %v1098 = vrcp.pop %v1090
  %v1099 = vrcp.pop %v1093
  %v1100 = vrcp.pop %v1096
  %v1101 = vmul.f32 %v1078, %v1097
  %v1102 = vmul.f32 %v1080, %v1098
  %v1103 = vmul.f32 %v1082, %v1099
  %v1104 = vmul.f32 %v1084, %v1100
  %v1105 = vpack.c.bf16 %v1102, %v1101
  %v1106 = vpack.c.bf16 %v1104, %v1103
  %1109 = vrot.lane.b32.xlu0 %v951, 64
  %v1110 = vpop.permute.xlu0 %1109
  %1111 = vrot.lane.b32.xlu0 %v952, 64
  %v1112 = vpop.permute.xlu0 %1111
  %v1116 = vsel %vm198, %v1105, 0
  %v1119 = vsel %vm198, %v1106, 0
  %1121 = vmatprep.subr.bf16.mxu0 0
  %1122 = vmatpush1.bf16.msra.mxu0 %v1110
  %1123 = vmatprep.subr.bf16.mxu0 0
  %1124 = vmatpush1.bf16.msra.mxu0 %v1112
  %1125 = vmatprep.subr.bf16.mxu0 0
  %1126 = vmatpush1.bf16.msra.mxu0 0
  %1127 = vmatprep.subr.bf16.mxu0 0
  %1128 = vmatpush1.bf16.msra.mxu0 0
  %1129 = vmatprep.subr.bf16.mxu0 0
  %1130 = vmatpush1.bf16.msra.mxu0 0
  %1131 = vmatprep.subr.bf16.mxu0 0
  %1132 = vmatpush1.bf16.msra.mxu0 0
  %1133 = vmatprep.subr.bf16.mxu0 0
  %1134 = vmatpush1.bf16.msra.mxu0 0
  %1135 = vmatprep.subr.bf16.mxu0 0
  %1136 = vmatpush1.bf16.msra.mxu0 0
  %1137 = vmatprep.subr.bf16.mxu0 0
  %1138 = vmatpush1.bf16.msra.mxu0 0
  %1139 = vmatprep.subr.bf16.mxu0 0
  %1140 = vmatpush1.bf16.msra.mxu0 0
  %1141 = vmatprep.subr.bf16.mxu0 0
  %1142 = vmatpush1.bf16.msra.mxu0 0
  %1143 = vmatprep.subr.bf16.mxu0 0
  %1144 = vmatpush1.bf16.msra.mxu0 0
  %1145 = vmatprep.subr.bf16.mxu0 0
  %1146 = vmatpush1.bf16.msra.mxu0 0
  %1147 = vmatprep.subr.bf16.mxu0 0
  %1148 = vmatpush1.bf16.msra.mxu0 0
  %1149 = vmatprep.subr.bf16.mxu0 0
  %1150 = vmatpush1.bf16.msra.mxu0 0
  %1151 = vmatprep.subr.bf16.mxu0 0
  %1152 = vmatpush1.bf16.msra.mxu0 0
  %1153 = vmatprep.mubr.bf16.mxu0 0
  %1154 = vmatmul.mubr.bf16.gmra.mrb[0].mxu0 %v1116
  %v1155 = vpop.f32.mrb[0].mxu0
  %v1156 = vadd.f32 0.0, %v1155
  %v1157 = vpop.f32.mrb[0].mxu0
  %v1158 = vpop.f32.mrb[0].mxu0
  %v1159 = vadd.f32 0.0, %v1158
  %v1160 = vpop.f32.mrb[0].mxu0
  %1161 = vmatprep.mubr.bf16.mxu0 0
  %1162 = vmatmul.mubr.bf16.gmra.mrb[0].mxu0 %v1119
  %v1163 = vpop.f32.mrb[0].mxu0
  %v1164 = vadd.f32 0.0, %v1163
  %v1165 = vpop.f32.mrb[0].mxu0
  %v1166 = vpop.f32.mrb[0].mxu0
  %v1167 = vadd.f32 0.0, %v1166
  %v1168 = vpop.f32.mrb[0].mxu0
  %1169 = vdwg.mxu0
  %1172 = vrot.lane.b32.xlu0 %v1164, 16
  %v1173 = vpop.permute.xlu0 %1172
  %1174 = vrot.lane.b32.xlu0 %v1167, 16
  %v1175 = vpop.permute.xlu0 %1174
  %v1178 = vsel %vm250, %v1156, %v1173
  %v1179 = vsel %vm250, %v1159, %v1175
  %v1180 = vpack.c.bf16 %v1179, %v1178
  %s1181 = scalar_lea.vmem %s8, 16
  %v1182 = vld [vmem:[%s1181] sm:$0xf]
  %v1183 = vld [vmem:[%s1181 + $0x4] sm:$0xf]
  %v1184 = vld [vmem:[%s1181 + $0x8] sm:$0xf]
  %v1185 = vld [vmem:[%s1181 + $0xc] sm:$0xf]
  %v1186 = vld [vmem:[%s12 + $0xb] sm:$0x1]
  %v1187 = vlaneseq
  %v1188 = vshrl.u32 %v1187, 7
  %v1189 = vsub.s32 0, %v1188
  %v1190 = vrot.slane %v1186, %v1189
  %v1195 = vunpack.c.l.b16 %v1182
  %v1196 = vunpack.c.l.b16 %v1183
  %v1197 = vunpack.c.l.b16 %v1184
  %v1198 = vunpack.c.l.b16 %v1185
  %v1199 = vpack.c.b16 %v1196, %v1195
  %v1200 = vpack.c.b16 %v1198, %v1197
  %v1204 = vsel %vm198, %v1180, 0
  %1206 = vmatprep.subr.bf16.mxu0 0
  %1207 = vmatpush1.bf16.msra.mxu0 %v1199
  %1208 = vmatprep.subr.bf16.mxu0 0
  %1209 = vmatpush1.bf16.msra.mxu0 %v1200
  %1210 = vmatprep.subr.bf16.mxu0 0
  %1211 = vmatpush1.bf16.msra.mxu0 0
  %1212 = vmatprep.subr.bf16.mxu0 0
  %1213 = vmatpush1.bf16.msra.mxu0 0
  %1214 = vmatprep.subr.bf16.mxu0 0
  %1215 = vmatpush1.bf16.msra.mxu0 0
  %1216 = vmatprep.subr.bf16.mxu0 0
  %1217 = vmatpush1.bf16.msra.mxu0 0
  %1218 = vmatprep.subr.bf16.mxu0 0
  %1219 = vmatpush1.bf16.msra.mxu0 0
  %1220 = vmatprep.subr.bf16.mxu0 0
  %1221 = vmatpush1.bf16.msra.mxu0 0
  %1222 = vmatprep.subr.bf16.mxu0 0
  %1223 = vmatpush1.bf16.msra.mxu0 0
  %1224 = vmatprep.subr.bf16.mxu0 0
  %1225 = vmatpush1.bf16.msra.mxu0 0
  %1226 = vmatprep.subr.bf16.mxu0 0
  %1227 = vmatpush1.bf16.msra.mxu0 0
  %1228 = vmatprep.subr.bf16.mxu0 0
  %1229 = vmatpush1.bf16.msra.mxu0 0
  %1230 = vmatprep.subr.bf16.mxu0 0
  %1231 = vmatpush1.bf16.msra.mxu0 0
  %1232 = vmatprep.subr.bf16.mxu0 0
  %1233 = vmatpush1.bf16.msra.mxu0 0
  %1234 = vmatprep.subr.bf16.mxu0 0
  %1235 = vmatpush1.bf16.msra.mxu0 0
  %1236 = vmatprep.subr.bf16.mxu0 0
  %1237 = vmatpush1.bf16.msra.mxu0 0
  %1238 = vmatprep.mubr.bf16.mxu0 0
  %1239 = vmatmul.mubr.bf16.gmra.mrb[0].mxu0 %v1204
  %v1240 = vpop.f32.mrb[0].mxu0
  %v1241 = vadd.f32 %v1190, %v1240
  %v1242 = vpop.f32.mrb[0].mxu0
  %v1243 = vpop.f32.mrb[0].mxu0
  %v1244 = vadd.f32 %v1190, %v1243
  %v1245 = vpop.f32.mrb[0].mxu0
  %1246 = vdwg.mxu0
  %v1247 = vadd.f32 %v1241, %v874
  %v1248 = vadd.f32 %v1244, %v875
  %v1249 = vld [vmem:[%s12 + $0xc] sm:$0x1]
  %v1250 = vld [vmem:[%s12 + $0xd] sm:$0x1]
  %v1251 = vsel %vm198, %v1247, 0.0
  %1252 = vadd.xlane.f32.xlu0 %v1251
  %v1253 = vpop.xlane.xlu0 %1252
  %v1254 = vsel %vm198, %v1248, 0.0
  %1255 = vadd.xlane.f32.xlu0 %v1254
  %v1256 = vpop.xlane.xlu0 %1255
  %v1257 = vmul.f32 %v1253, %v205
  %v1258 = vmul.f32 %v1256, %v205
  %v1259 = vsub.f32 %v1247, %v1257
  %v1260 = vsub.f32 %v1248, %v1258
  %v1261 = vmul.f32 %v1259, %v1259
  %v1262 = vmul.f32 %v1260, %v1260
  %v1263 = vsel %vm198, %v1261, 0.0
  %1264 = vadd.xlane.f32.xlu0 %v1263
  %v1265 = vpop.xlane.xlu0 %1264
  %v1266 = vsel %vm198, %v1262, 0.0
  %1267 = vadd.xlane.f32.xlu0 %v1266
  %v1268 = vpop.xlane.xlu0 %1267
  %v1269 = vmul.f32 %v1265, %v205
  %v1270 = vmul.f32 %v1268, %v205
  %v1271 = vadd.f32 %v1269, 1e-12
  %v1272 = vadd.f32 %v1270, 1e-12
  %v1273 = vrsqrt.pop %v1271
  %v1274 = vrsqrt.pop %v1272
  %v1275 = vmul.f32 %v1259, %v1273
  %v1276 = vmul.f32 %v1260, %v1274
  %v1277 = vlaneseq
  %v1278 = vshrl.u32 %v1277, 7
  %v1279 = vsub.s32 0, %v1278
  %v1280 = vrot.slane %v1249, %v1279
  %v1281 = vmul.f32 %v1275, %v1280
  %v1282 = vmul.f32 %v1276, %v1280
  %v1283 = vlaneseq
  %v1284 = vshrl.u32 %v1283, 7
  %v1285 = vsub.s32 0, %v1284
  %v1286 = vrot.slane %v1250, %v1285
  %v1287 = vadd.f32 %v1281, %v1286
  %v1288 = vadd.f32 %v1282, %v1286
  %v1289 = vpack.c.bf16 %v1288, %v1287
  %s1290 = scalar_lea.vmem %s9, 16
  %v1291 = vld [vmem:[%s1290] sm:$0xf]
  %v1292 = vld [vmem:[%s1290 + $0x4] sm:$0xf]
  %v1293 = vld [vmem:[%s1290 + $0x8] sm:$0xf]
  %v1294 = vld [vmem:[%s1290 + $0xc] sm:$0xf]
  %v1295 = vld [vmem:[%s12 + $0xe] sm:$0x1]
  %v1296 = vlaneseq
  %v1297 = vshrl.u32 %v1296, 7
  %v1298 = vsub.s32 0, %v1297
  %v1299 = vrot.slane %v1295, %v1298
  %v1304 = vunpack.c.l.b16 %v1291
  %v1305 = vunpack.c.l.b16 %v1292
  %v1306 = vunpack.c.l.b16 %v1293
  %v1307 = vunpack.c.l.b16 %v1294
  %v1308 = vpack.c.b16 %v1305, %v1304
  %v1309 = vpack.c.b16 %v1307, %v1306
  %v1313 = vsel %vm198, %v1289, 0
  %1315 = vmatprep.subr.bf16.mxu0 0
  %1316 = vmatpush1.bf16.msra.mxu0 %v1308
  %1317 = vmatprep.subr.bf16.mxu0 0
  %1318 = vmatpush1.bf16.msra.mxu0 %v1309
  %1319 = vmatprep.subr.bf16.mxu0 0
  %1320 = vmatpush1.bf16.msra.mxu0 0
  %1321 = vmatprep.subr.bf16.mxu0 0
  %1322 = vmatpush1.bf16.msra.mxu0 0
  %1323 = vmatprep.subr.bf16.mxu0 0
  %1324 = vmatpush1.bf16.msra.mxu0 0
  %1325 = vmatprep.subr.bf16.mxu0 0
  %1326 = vmatpush1.bf16.msra.mxu0 0
  %1327 = vmatprep.subr.bf16.mxu0 0
  %1328 = vmatpush1.bf16.msra.mxu0 0
  %1329 = vmatprep.subr.bf16.mxu0 0
  %1330 = vmatpush1.bf16.msra.mxu0 0
  %1331 = vmatprep.subr.bf16.mxu0 0
  %1332 = vmatpush1.bf16.msra.mxu0 0
  %1333 = vmatprep.subr.bf16.mxu0 0
  %1334 = vmatpush1.bf16.msra.mxu0 0
  %1335 = vmatprep.subr.bf16.mxu0 0
  %1336 = vmatpush1.bf16.msra.mxu0 0
  %1337 = vmatprep.subr.bf16.mxu0 0
  %1338 = vmatpush1.bf16.msra.mxu0 0
  %1339 = vmatprep.subr.bf16.mxu0 0
  %1340 = vmatpush1.bf16.msra.mxu0 0
  %1341 = vmatprep.subr.bf16.mxu0 0
  %1342 = vmatpush1.bf16.msra.mxu0 0
  %1343 = vmatprep.subr.bf16.mxu0 0
  %1344 = vmatpush1.bf16.msra.mxu0 0
  %1345 = vmatprep.subr.bf16.mxu0 0
  %1346 = vmatpush1.bf16.msra.mxu0 0
  %1347 = vmatprep.mubr.bf16.mxu0 0
  %1348 = vmatmul.mubr.bf16.gmra.mrb[0].mxu0 %v1313
  %v1349 = vpop.f32.mrb[0].mxu0
  %v1350 = vadd.f32 %v1299, %v1349
  %v1351 = vpop.f32.mrb[0].mxu0
  %v1352 = vpop.f32.mrb[0].mxu0
  %v1353 = vadd.f32 %v1299, %v1352
  %v1354 = vpop.f32.mrb[0].mxu0
  %1355 = vdwg.mxu0
  %v1356 = vmul.f32 %v1350, 0.5
  %v1357 = vmul.f32 %v1353, 0.5
  %v1358 = vmul.f32 %v1350, 0.70710677
  %v1359 = vmul.f32 %v1353, 0.70710677
  %v1360 = verf.f32.pop %v1358
  %v1361 = verf.f32.pop %v1359
  %v1362 = vadd.f32 %v1360, 1.0
  %v1363 = vadd.f32 %v1361, 1.0
  %v1364 = vmul.f32 %v1356, %v1362
  %v1365 = vmul.f32 %v1357, %v1363
  %v1366 = vpack.c.bf16 %v1365, %v1364
  %s1367 = scalar_lea.vmem %s10, 32
  %v1368 = vld [vmem:[%s1367] sm:$0xf]
  %v1369 = vld [vmem:[%s1367 + $0x4] sm:$0xf]
  %v1370 = vld [vmem:[%s1367 + $0x8] sm:$0xf]
  %v1371 = vld [vmem:[%s1367 + $0xc] sm:$0xf]
  %v1372 = vld [vmem:[%s1367 + $0x10] sm:$0xf]
  %v1373 = vld [vmem:[%s1367 + $0x14] sm:$0xf]
  %v1374 = vld [vmem:[%s1367 + $0x18] sm:$0xf]
  %v1375 = vld [vmem:[%s1367 + $0x1c] sm:$0xf]
  %v1376 = vld [vmem:[%s12 + $0xf] sm:$0x1]
  %v1377 = vlaneseq
  %v1378 = vshrl.u32 %v1377, 7
  %v1379 = vsub.s32 0, %v1378
  %v1380 = vrot.slane %v1376, %v1379
  %v1389 = vunpack.c.l.b16 %v1368
  %v1390 = vunpack.c.l.b16 %v1369
  %v1391 = vunpack.c.l.b16 %v1370
  %v1392 = vunpack.c.l.b16 %v1371
  %v1393 = vunpack.c.l.b16 %v1372
  %v1394 = vunpack.c.l.b16 %v1373
  %v1395 = vunpack.c.l.b16 %v1374
  %v1396 = vunpack.c.l.b16 %v1375
  %v1397 = vpack.c.b16 %v1390, %v1389
  %v1398 = vpack.c.b16 %v1392, %v1391
  %v1399 = vpack.c.b16 %v1394, %v1393
  %v1400 = vpack.c.b16 %v1396, %v1395
  %v1406 = vsel %vm789, %v1366, 0
  %1408 = vmatprep.subr.bf16.mxu0 0
  %1409 = vmatpush1.bf16.msra.mxu0 %v1397
  %1410 = vmatprep.subr.bf16.mxu0 0
  %1411 = vmatpush1.bf16.msra.mxu0 %v1398
  %1412 = vmatprep.subr.bf16.mxu0 0
  %1413 = vmatpush1.bf16.msra.mxu0 %v1399
  %1414 = vmatprep.subr.bf16.mxu0 0
  %1415 = vmatpush1.bf16.msra.mxu0 %v1400
  %1416 = vmatprep.subr.bf16.mxu0 0
  %1417 = vmatpush1.bf16.msra.mxu0 0
  %1418 = vmatprep.subr.bf16.mxu0 0
  %1419 = vmatpush1.bf16.msra.mxu0 0
  %1420 = vmatprep.subr.bf16.mxu0 0
  %1421 = vmatpush1.bf16.msra.mxu0 0
  %1422 = vmatprep.subr.bf16.mxu0 0
  %1423 = vmatpush1.bf16.msra.mxu0 0
  %1424 = vmatprep.subr.bf16.mxu0 0
  %1425 = vmatpush1.bf16.msra.mxu0 0
  %1426 = vmatprep.subr.bf16.mxu0 0
  %1427 = vmatpush1.bf16.msra.mxu0 0
  %1428 = vmatprep.subr.bf16.mxu0 0
  %1429 = vmatpush1.bf16.msra.mxu0 0
  %1430 = vmatprep.subr.bf16.mxu0 0
  %1431 = vmatpush1.bf16.msra.mxu0 0
  %1432 = vmatprep.subr.bf16.mxu0 0
  %1433 = vmatpush1.bf16.msra.mxu0 0
  %1434 = vmatprep.subr.bf16.mxu0 0
  %1435 = vmatpush1.bf16.msra.mxu0 0
  %1436 = vmatprep.subr.bf16.mxu0 0
  %1437 = vmatpush1.bf16.msra.mxu0 0
  %1438 = vmatprep.subr.bf16.mxu0 0
  %1439 = vmatpush1.bf16.msra.mxu0 0
  %1440 = vmatprep.mubr.bf16.mxu0 0
  %1441 = vmatmul.mubr.bf16.gmra.mrb[0].mxu0 %v1406
  %v1442 = vpop.f32.mrb[0].mxu0
  %v1443 = vadd.f32 %v1380, %v1442
  %v1444 = vpop.f32.mrb[0].mxu0
  %v1445 = vpop.f32.mrb[0].mxu0
  %v1446 = vadd.f32 %v1380, %v1445
  %v1447 = vpop.f32.mrb[0].mxu0
  %1448 = vdwg.mxu0
  %v1449 = vadd.f32 %v1443, %v1287
  %v1450 = vadd.f32 %v1446, %v1288
  %v1451 = vld [vmem:[%s12 + $0x10] sm:$0x1]
  %v1452 = vld [vmem:[%s12 + $0x11] sm:$0x1]
  %v1453 = vsel %vm198, %v1449, 0.0
  %1454 = vadd.xlane.f32.xlu0 %v1453
  %v1455 = vpop.xlane.xlu0 %1454
  %v1456 = vsel %vm198, %v1450, 0.0
  %1457 = vadd.xlane.f32.xlu0 %v1456
  %v1458 = vpop.xlane.xlu0 %1457
  %v1459 = vmul.f32 %v1455, %v205
  %v1460 = vmul.f32 %v1458, %v205
  %v1461 = vsub.f32 %v1449, %v1459
  %v1462 = vsub.f32 %v1450, %v1460
  %v1463 = vmul.f32 %v1461, %v1461
  %v1464 = vmul.f32 %v1462, %v1462
  %v1465 = vsel %vm198, %v1463, 0.0
  %1466 = vadd.xlane.f32.xlu0 %v1465
  %v1467 = vpop.xlane.xlu0 %1466
  %v1468 = vsel %vm198, %v1464, 0.0
  %1469 = vadd.xlane.f32.xlu0 %v1468
  %v1470 = vpop.xlane.xlu0 %1469
  %v1471 = vmul.f32 %v1467, %v205
  %v1472 = vmul.f32 %v1470, %v205
  %v1473 = vadd.f32 %v1471, 1e-12
  %v1474 = vadd.f32 %v1472, 1e-12
  %v1475 = vrsqrt.pop %v1473
  %v1476 = vrsqrt.pop %v1474
  %v1477 = vmul.f32 %v1461, %v1475
  %v1478 = vmul.f32 %v1462, %v1476
  %v1479 = vlaneseq
  %v1480 = vshrl.u32 %v1479, 7
  %v1481 = vsub.s32 0, %v1480
  %v1482 = vrot.slane %v1451, %v1481
  %v1483 = vmul.f32 %v1477, %v1482
  %v1484 = vmul.f32 %v1478, %v1482
  %v1485 = vlaneseq
  %v1486 = vshrl.u32 %v1485, 7
  %v1487 = vsub.s32 0, %v1486
  %v1488 = vrot.slane %v1452, %v1487
  %v1489 = vadd.f32 %v1483, %v1488
  %v1490 = vadd.f32 %v1484, %v1488
  %v1491 = vpack.c.bf16 %v1490, %v1489
  %v1492 = vld [vmem:[%s11] sm:$0xf]
  %v1493 = vld [vmem:[%s11 + $0x4] sm:$0xf]
  %v1494 = vld [vmem:[%s11 + $0x8] sm:$0xf]
  %v1495 = vld [vmem:[%s11 + $0xc] sm:$0xf]
  %v1496 = vld [vmem:[%s12 + $0x12] sm:$0x1]
  %v1497 = vlaneseq
  %v1498 = vshrl.u32 %v1497, 7
  %v1499 = vsub.s32 0, %v1498
  %v1500 = vrot.slane %v1496, %v1499
  %v1505 = vunpack.c.l.b16 %v1492
  %v1506 = vunpack.c.l.b16 %v1493
  %v1507 = vunpack.c.l.b16 %v1494
  %v1508 = vunpack.c.l.b16 %v1495
  %v1509 = vpack.c.b16 %v1506, %v1505
  %v1510 = vpack.c.b16 %v1508, %v1507
  %v1514 = vsel %vm198, %v1491, 0
  %1516 = vmatprep.subr.bf16.mxu0 0
  %1517 = vmatpush1.bf16.msra.mxu0 %v1509
  %1518 = vmatprep.subr.bf16.mxu0 0
  %1519 = vmatpush1.bf16.msra.mxu0 %v1510
  %1520 = vmatprep.subr.bf16.mxu0 0
  %1521 = vmatpush1.bf16.msra.mxu0 0
  %1522 = vmatprep.subr.bf16.mxu0 0
  %1523 = vmatpush1.bf16.msra.mxu0 0
  %1524 = vmatprep.subr.bf16.mxu0 0
  %1525 = vmatpush1.bf16.msra.mxu0 0
  %1526 = vmatprep.subr.bf16.mxu0 0
  %1527 = vmatpush1.bf16.msra.mxu0 0
  %1528 = vmatprep.subr.bf16.mxu0 0
  %1529 = vmatpush1.bf16.msra.mxu0 0
  %1530 = vmatprep.subr.bf16.mxu0 0
  %1531 = vmatpush1.bf16.msra.mxu0 0
  %1532 = vmatprep.subr.bf16.mxu0 0
  %1533 = vmatpush1.bf16.msra.mxu0 0
  %1534 = vmatprep.subr.bf16.mxu0 0
  %1535 = vmatpush1.bf16.msra.mxu0 0
  %1536 = vmatprep.subr.bf16.mxu0 0
  %1537 = vmatpush1.bf16.msra.mxu0 0
  %1538 = vmatprep.subr.bf16.mxu0 0
  %1539 = vmatpush1.bf16.msra.mxu0 0
  %1540 = vmatprep.subr.bf16.mxu0 0
  %1541 = vmatpush1.bf16.msra.mxu0 0
  %1542 = vmatprep.subr.bf16.mxu0 0
  %1543 = vmatpush1.bf16.msra.mxu0 0
  %1544 = vmatprep.subr.bf16.mxu0 0
  %1545 = vmatpush1.bf16.msra.mxu0 0
  %1546 = vmatprep.subr.bf16.mxu0 0
  %1547 = vmatpush1.bf16.msra.mxu0 0
  %1548 = vmatprep.mubr.bf16.mxu0 0
  %1549 = vmatmul.mubr.bf16.gmra.mrb[0].mxu0 %v1514
  %v1550 = vpop.f32.mrb[0].mxu0
  %v1551 = vadd.f32 %v1500, %v1550
  %v1552 = vpop.f32.mrb[0].mxu0
  %v1553 = vpop.f32.mrb[0].mxu0
  %v1554 = vadd.f32 %v1500, %v1553
  %v1555 = vpop.f32.mrb[0].mxu0
  %1556 = vdwg.mxu0
  %1557 = vst [vmem:[%s13] sm:$0xff] %v1551
  %1558 = vst [vmem:[%s13 + $0x8] sm:$0xff] %v1554
  // Predicated region
  $region54: #{model_forward.1} parent=0 // pred_check
    _
  $region55: #{model_forward.1} parent=0 // pred_check_branch
    %1560 = sbr.rel (0) target = $region57
  $region56: #{model_forward.1} parent=0 // pred_region
    _
  $region57: #{model_forward.1} parent=0 // pred_fallthru
    _
  // Predicated region
  $region58: #{model_forward.1} parent=0 // pred_check
    _
  $region59: #{model_forward.1} parent=0 // pred_check_branch
    %1562 = sbr.rel (0) target = $region61
  $region60: #{model_forward.1} parent=0 // pred_region
    _
  $region61: #{model_forward.1} parent=0 // pred_fallthru
    _

</llo_original>
